<compile_context>
chip_gen: v6e
topology: v6e:2x2x1
jax: 0.10.0
libtpu: 0.0.40
codegen_flags: <defaults>
</compile_context>

<pallas_src>
import functools

import jax
import jax.numpy as jnp
import numpy as np
from jax import lax
from jax.experimental import pallas as pl
from jax.experimental.pallas import tpu as pltpu

OUT_SIZE = 4  # output_size of the adaptive max pool


def _roi_pool_kernel(idx_ref, pos_ref, ys_ref, ye_ref, xs_ref, xe_ref,  # SMEM prefetch
                     img_ref, out_ref, *, out_size):
    # img_ref block: (1, H, W, C)  -- NHWC, channels on lanes.
    # out_ref block: (1, out_size, out_size, C)
    i = pl.program_id(0)
    img = img_ref[0]                                    # (H, W, C)
    H, W, C = img.shape
    neg = jnp.array(-jnp.inf, dtype=img.dtype)          # float image dtype assumed

    # ---- pass 1: separable column max over W, one masked reduce per x-bin ----
    col = lax.broadcasted_iota(jnp.int32, (1, W, 1), 1)         # broadcasts over H & C
    col_max = []
    for ow in range(out_size):
        xs = xs_ref[ow, i]
        xe = xe_ref[ow, i]
        cmask = (col >= xs) & (col < xe)                        # (1, W, 1)
        col_max.append(jnp.max(jnp.where(cmask, img, neg), axis=1))  # (H, C)
    col_max = jnp.stack(col_max, axis=0)                        # (out_size, H, C)

    # ---- pass 2: row max over H on the small partials; lane-dense row stores ----
    row = lax.broadcasted_iota(jnp.int32, (1, H, 1), 1)         # broadcasts over bins & C
    for oh in range(out_size):
        ys = ys_ref[oh, i]
        ye = ye_ref[oh, i]
        rmask = (row >= ys) & (row < ye)                        # (1, H, 1)
        binvals = jnp.max(jnp.where(rmask, col_max, neg), axis=1)    # (out_size, C)
        out_ref[0, oh] = binvals.astype(out_ref.dtype)


def slow_roi_pool(images, rois, roi_idx, output_size=OUT_SIZE):
    """images: (N, C, H, W) f32; rois: (n, 4) normalized [x1,y1,x2,y2]; roi_idx: (n,) int."""
    N, C, H, W = images.shape
    n = rois.shape[0]

    # ---- integer ROI coords (matches np.floor/np.ceil in the PyTorch module) ----
    x1 = jnp.clip(jnp.floor(rois[:, 0] * W), 0, W).astype(jnp.int32)
    y1 = jnp.clip(jnp.floor(rois[:, 1] * H), 0, H).astype(jnp.int32)
    x2 = jnp.clip(jnp.ceil(rois[:, 2] * W), 0, W).astype(jnp.int32)
    y2 = jnp.clip(jnp.ceil(rois[:, 3] * H), 0, H).astype(jnp.int32)

    # adaptive-max-pool bin boundaries in absolute image coords, laid out (out_size, n)
    # so the long (n) axis is last in SMEM.
    hin, win = y2 - y1, x2 - x1
    b = jnp.arange(output_size, dtype=jnp.int32)[:, None]                  # (out, 1)
    ys = (y1[None, :] + (b * hin[None, :]) // output_size).astype(jnp.int32)
    ye = (y1[None, :] + ((b + 1) * hin[None, :] + output_size - 1)
          // output_size).astype(jnp.int32)
    xs = (x1[None, :] + (b * win[None, :]) // output_size).astype(jnp.int32)
    xe = (x1[None, :] + ((b + 1) * win[None, :] + output_size - 1)
          // output_size).astype(jnp.int32)

    roi_idx = roi_idx.astype(jnp.int32)

    # Sort ROIs by image index so consecutive grid steps reuse the same input block
    # (Pallas skips the re-DMA).  The sorted-order permutation is prefetched and the
    # output BlockSpec scatters each pooled block straight back to its original slot,
    # so no gather/un-sort is needed afterwards.
    order = jnp.argsort(roi_idx).astype(jnp.int32)              # stable
    roi_idx_s = roi_idx[order]
    ys_s, ye_s, xs_s, xe_s = ys[:, order], ye[:, order], xs[:, order], xe[:, order]

    # NHWC so channels land on lanes inside the kernel.
    images_nhwc = jnp.transpose(images, (0, 2, 3, 1))           # (N, H, W, C)

    kernel = functools.partial(_roi_pool_kernel, out_size=output_size)

    grid_spec = pltpu.PrefetchScalarGridSpec(
        num_scalar_prefetch=6,
        grid=(n,),
        in_specs=[
            # Whole image of the ROI's batch entry (double-buffered by Pallas).
            # TODO(synk): for very large C*H*W (v7x 64 MiB VMEM) stream H in a
            # second grid axis with running column-max scratch instead.
            pl.BlockSpec((1, H, W, C),
                         lambda i, idx, pos, ys, ye, xs, xe: (idx[i], 0, 0, 0)),
        ],
        out_specs=pl.BlockSpec((1, output_size, output_size, C),
                               lambda i, idx, pos, ys, ye, xs, xe: (pos[i], 0, 0, 0)),
    )

    out_nhwc = pl.pallas_call(
        kernel,
        out_shape=jax.ShapeDtypeStruct((n, output_size, output_size, C), images.dtype),
        grid_spec=grid_spec,
        compiler_params=pltpu.CompilerParams(dimension_semantics=("parallel",)),
    )(roi_idx_s, order, ys_s, ye_s, xs_s, xe_s, images_nhwc)

    # back to NCHW to match the PyTorch module
    return jnp.transpose(out_nhwc, (0, 3, 1, 2))


def _reference_roi_pool(images, rois, roi_idx, output_size=OUT_SIZE):
    """NumPy reference mirroring the PyTorch module (AdaptiveMaxPool2d semantics)."""
    images = np.asarray(images)
    rois = np.asarray(rois)
    roi_idx = np.asarray(roi_idx)
    N, C, H, W = images.shape
    n = rois.shape[0]
    x1 = np.clip(np.floor(rois[:, 0] * W), 0, W).astype(int)
    y1 = np.clip(np.floor(rois[:, 1] * H), 0, H).astype(int)
    x2 = np.clip(np.ceil(rois[:, 2] * W), 0, W).astype(int)
    y2 = np.clip(np.ceil(rois[:, 3] * H), 0, H).astype(int)
    out = np.empty((n, C, output_size, output_size), dtype=images.dtype)
    for i in range(n):
        crop = images[roi_idx[i], :, y1[i]:y2[i], x1[i]:x2[i]]
        hin, win = crop.shape[1], crop.shape[2]
        for oh in range(output_size):
            hs = (oh * hin) // output_size
            he = -(-((oh + 1) * hin) // output_size)
            for ow in range(output_size):
                ws = (ow * win) // output_size
                we = -(-((ow + 1) * win) // output_size)
                out[i, :, oh, ow] = crop[:, hs:he, ws:we].max(axis=(1, 2))
    return out


if __name__ == "__main__":
    key = jax.random.PRNGKey(0)
    k_img, k_lo, k_hi = jax.random.split(key, 3)

    N, C, H, W = 2, 4, 16, 16
    n_rois = 3

    images = jax.random.normal(k_img, (N, C, H, W), dtype=jnp.float32)
    # normalized rois [x1, y1, x2, y2], guaranteed non-degenerate
    lo = jax.random.uniform(k_lo, (n_rois, 2), minval=0.0, maxval=0.4)
    hi = jax.random.uniform(k_hi, (n_rois, 2), minval=0.6, maxval=1.0)
    rois = jnp.concatenate([lo[:, 0:1], lo[:, 1:2], hi[:, 0:1], hi[:, 1:2]], axis=1)
    roi_idx = jnp.array([0, 1, 0], dtype=jnp.int32)

    out = slow_roi_pool(images, rois, roi_idx, output_size=OUT_SIZE)
    out = jax.block_until_ready(out)

    ref = _reference_roi_pool(images, rois, roi_idx, output_size=OUT_SIZE)
    np.testing.assert_allclose(np.asarray(out), ref, atol=1e-6, rtol=1e-6)

    print("KERNEL_OK")
</pallas_src>

<mosaic_0001>
module attributes {stable_mosaic.version = 11 : i64} {
  func.func @_roi_pool_kernel(%arg0: i32, %arg1: memref<3xi32, #tpu.memory_space<smem>>, %arg2: memref<3xi32, #tpu.memory_space<smem>>, %arg3: memref<4x3xi32, #tpu.memory_space<smem>>, %arg4: memref<4x3xi32, #tpu.memory_space<smem>>, %arg5: memref<4x3xi32, #tpu.memory_space<smem>>, %arg6: memref<4x3xi32, #tpu.memory_space<smem>>, %arg7: memref<1x16x16x4xf32, #tpu.memory_space<vmem>>, %arg8: memref<1x4x4x4xf32, #tpu.memory_space<vmem>>) attributes {dimension_semantics = [#tpu.dimension_semantics<parallel>], iteration_bounds = array<i64: 3>, scalar_prefetch = 6 : i64, scratch_operands = 0 : i64, tpu.core_type = #tpu.core_type<tc>, window_params = [{transform_indices = @transform_0, window_bounds = array<i64: 1, 16, 16, 4>}, {transform_indices = @transform_1, window_bounds = array<i64: 1, 4, 4, 4>}]} {
    %c0 = arith.constant 0 : index
    %c0_0 = arith.constant 0 : index
    %c0_1 = arith.constant 0 : index
    %c0_2 = arith.constant 0 : index
    %0 = vector.load %arg7[%c0, %c0_0, %c0_1, %c0_2] : memref<1x16x16x4xf32, #tpu.memory_space<vmem>>, vector<1x16x16x4xf32>
    %1 = vector.shape_cast %0 : vector<1x16x16x4xf32> to vector<16x16x4xf32>
    %2 = tpu.iota {dimensions = array<i32: 1>} : vector<1x16x1xi32>
    %c0_3 = arith.constant 0 : index
    %3 = arith.index_cast %arg0 : i32 to index
    %4 = memref.load %arg5[%c0_3, %3] : memref<4x3xi32, #tpu.memory_space<smem>>
    %c0_4 = arith.constant 0 : index
    %5 = arith.index_cast %arg0 : i32 to index
    %6 = memref.load %arg6[%c0_4, %5] : memref<4x3xi32, #tpu.memory_space<smem>>
    %7 = vector.broadcast %4 : i32 to vector<1x16x1xi32>
    %8 = arith.cmpi sge, %2, %7 : vector<1x16x1xi32>
    %9 = vector.broadcast %6 : i32 to vector<1x16x1xi32>
    %10 = arith.cmpi slt, %2, %9 : vector<1x16x1xi32>
    %11 = arith.andi %8, %10 : vector<1x16x1xi1>
    %cst = arith.constant 0xFF800000 : f32
    %12 = vector.shape_cast %11 : vector<1x16x1xi1> to vector<1x16x1xi1>
    %13 = vector.broadcast %12 : vector<1x16x1xi1> to vector<16x16x4xi1>
    %14 = vector.broadcast %cst : f32 to vector<16x16x4xf32>
    %15 = arith.select %13, %1, %14 : vector<16x16x4xi1>, vector<16x16x4xf32>
    %cst_5 = arith.constant dense<0xFF800000> : vector<16x4xf32>
    %16 = vector.multi_reduction <maximumf>, %15, %cst_5 [1] : vector<16x16x4xf32> to vector<16x4xf32>
    %c1 = arith.constant 1 : index
    %17 = arith.index_cast %arg0 : i32 to index
    %18 = memref.load %arg5[%c1, %17] : memref<4x3xi32, #tpu.memory_space<smem>>
    %c1_6 = arith.constant 1 : index
    %19 = arith.index_cast %arg0 : i32 to index
    %20 = memref.load %arg6[%c1_6, %19] : memref<4x3xi32, #tpu.memory_space<smem>>
    %21 = vector.broadcast %18 : i32 to vector<1x16x1xi32>
    %22 = arith.cmpi sge, %2, %21 : vector<1x16x1xi32>
    %23 = vector.broadcast %20 : i32 to vector<1x16x1xi32>
    %24 = arith.cmpi slt, %2, %23 : vector<1x16x1xi32>
    %25 = arith.andi %22, %24 : vector<1x16x1xi1>
    %cst_7 = arith.constant 0xFF800000 : f32
    %26 = vector.shape_cast %25 : vector<1x16x1xi1> to vector<1x16x1xi1>
    %27 = vector.broadcast %26 : vector<1x16x1xi1> to vector<16x16x4xi1>
    %28 = vector.broadcast %cst_7 : f32 to vector<16x16x4xf32>
    %29 = arith.select %27, %1, %28 : vector<16x16x4xi1>, vector<16x16x4xf32>
    %cst_8 = arith.constant dense<0xFF800000> : vector<16x4xf32>
    %30 = vector.multi_reduction <maximumf>, %29, %cst_8 [1] : vector<16x16x4xf32> to vector<16x4xf32>
    %c2 = arith.constant 2 : index
    %31 = arith.index_cast %arg0 : i32 to index
    %32 = memref.load %arg5[%c2, %31] : memref<4x3xi32, #tpu.memory_space<smem>>
    %c2_9 = arith.constant 2 : index
    %33 = arith.index_cast %arg0 : i32 to index
    %34 = memref.load %arg6[%c2_9, %33] : memref<4x3xi32, #tpu.memory_space<smem>>
    %35 = vector.broadcast %32 : i32 to vector<1x16x1xi32>
    %36 = arith.cmpi sge, %2, %35 : vector<1x16x1xi32>
    %37 = vector.broadcast %34 : i32 to vector<1x16x1xi32>
    %38 = arith.cmpi slt, %2, %37 : vector<1x16x1xi32>
    %39 = arith.andi %36, %38 : vector<1x16x1xi1>
    %cst_10 = arith.constant 0xFF800000 : f32
    %40 = vector.shape_cast %39 : vector<1x16x1xi1> to vector<1x16x1xi1>
    %41 = vector.broadcast %40 : vector<1x16x1xi1> to vector<16x16x4xi1>
    %42 = vector.broadcast %cst_10 : f32 to vector<16x16x4xf32>
    %43 = arith.select %41, %1, %42 : vector<16x16x4xi1>, vector<16x16x4xf32>
    %cst_11 = arith.constant dense<0xFF800000> : vector<16x4xf32>
    %44 = vector.multi_reduction <maximumf>, %43, %cst_11 [1] : vector<16x16x4xf32> to vector<16x4xf32>
    %c3 = arith.constant 3 : index
    %45 = arith.index_cast %arg0 : i32 to index
    %46 = memref.load %arg5[%c3, %45] : memref<4x3xi32, #tpu.memory_space<smem>>
    %c3_12 = arith.constant 3 : index
    %47 = arith.index_cast %arg0 : i32 to index
    %48 = memref.load %arg6[%c3_12, %47] : memref<4x3xi32, #tpu.memory_space<smem>>
    %49 = vector.broadcast %46 : i32 to vector<1x16x1xi32>
    %50 = arith.cmpi sge, %2, %49 : vector<1x16x1xi32>
    %51 = vector.broadcast %48 : i32 to vector<1x16x1xi32>
    %52 = arith.cmpi slt, %2, %51 : vector<1x16x1xi32>
    %53 = arith.andi %50, %52 : vector<1x16x1xi1>
    %cst_13 = arith.constant 0xFF800000 : f32
    %54 = vector.shape_cast %53 : vector<1x16x1xi1> to vector<1x16x1xi1>
    %55 = vector.broadcast %54 : vector<1x16x1xi1> to vector<16x16x4xi1>
    %56 = vector.broadcast %cst_13 : f32 to vector<16x16x4xf32>
    %57 = arith.select %55, %1, %56 : vector<16x16x4xi1>, vector<16x16x4xf32>
    %cst_14 = arith.constant dense<0xFF800000> : vector<16x4xf32>
    %58 = vector.multi_reduction <maximumf>, %57, %cst_14 [1] : vector<16x16x4xf32> to vector<16x4xf32>
    %59 = vector.shape_cast %16 : vector<16x4xf32> to vector<1x16x4xf32>
    %60 = vector.shape_cast %30 : vector<16x4xf32> to vector<1x16x4xf32>
    %61 = vector.shape_cast %44 : vector<16x4xf32> to vector<1x16x4xf32>
    %62 = vector.shape_cast %58 : vector<16x4xf32> to vector<1x16x4xf32>
    %63 = tpu.concatenate %59, %60, %61, %62 in 0 : vector<1x16x4xf32>, vector<1x16x4xf32>, vector<1x16x4xf32>, vector<1x16x4xf32> -> vector<4x16x4xf32>
    %64 = tpu.iota {dimensions = array<i32: 1>} : vector<1x16x1xi32>
    %c0_15 = arith.constant 0 : index
    %65 = arith.index_cast %arg0 : i32 to index
    %66 = memref.load %arg3[%c0_15, %65] : memref<4x3xi32, #tpu.memory_space<smem>>
    %c0_16 = arith.constant 0 : index
    %67 = arith.index_cast %arg0 : i32 to index
    %68 = memref.load %arg4[%c0_16, %67] : memref<4x3xi32, #tpu.memory_space<smem>>
    %69 = vector.broadcast %66 : i32 to vector<1x16x1xi32>
    %70 = arith.cmpi sge, %64, %69 : vector<1x16x1xi32>
    %71 = vector.broadcast %68 : i32 to vector<1x16x1xi32>
    %72 = arith.cmpi slt, %64, %71 : vector<1x16x1xi32>
    %73 = arith.andi %70, %72 : vector<1x16x1xi1>
    %cst_17 = arith.constant 0xFF800000 : f32
    %74 = vector.shape_cast %73 : vector<1x16x1xi1> to vector<1x16x1xi1>
    %75 = vector.broadcast %74 : vector<1x16x1xi1> to vector<4x16x4xi1>
    %76 = vector.broadcast %cst_17 : f32 to vector<4x16x4xf32>
    %77 = arith.select %75, %63, %76 : vector<4x16x4xi1>, vector<4x16x4xf32>
    %cst_18 = arith.constant dense<0xFF800000> : vector<4x4xf32>
    %78 = vector.multi_reduction <maximumf>, %77, %cst_18 [1] : vector<4x16x4xf32> to vector<4x4xf32>
    %c0_19 = arith.constant 0 : index
    %c0_20 = arith.constant 0 : index
    %c0_21 = arith.constant 0 : index
    %c0_22 = arith.constant 0 : index
    %79 = vector.load %arg8[%c0_19, %c0_20, %c0_21, %c0_22] : memref<1x4x4x4xf32, #tpu.memory_space<vmem>>, vector<1x1x4x4xf32>
    %80 = vector.shape_cast %79 : vector<1x1x4x4xf32> to vector<4x4xf32>
    %81 = vector.shape_cast %78 : vector<4x4xf32> to vector<1x1x4x4xf32>
    tpu.vector_store %arg8[%c0_19, %c0_20, %c0_21, %c0_22], %81 {strides = array<i32>} : memref<1x4x4x4xf32, #tpu.memory_space<vmem>>, vector<1x1x4x4xf32>,
    %c1_23 = arith.constant 1 : index
    %82 = arith.index_cast %arg0 : i32 to index
    %83 = memref.load %arg3[%c1_23, %82] : memref<4x3xi32, #tpu.memory_space<smem>>
    %c1_24 = arith.constant 1 : index
    %84 = arith.index_cast %arg0 : i32 to index
    %85 = memref.load %arg4[%c1_24, %84] : memref<4x3xi32, #tpu.memory_space<smem>>
    %86 = vector.broadcast %83 : i32 to vector<1x16x1xi32>
    %87 = arith.cmpi sge, %64, %86 : vector<1x16x1xi32>
    %88 = vector.broadcast %85 : i32 to vector<1x16x1xi32>
    %89 = arith.cmpi slt, %64, %88 : vector<1x16x1xi32>
    %90 = arith.andi %87, %89 : vector<1x16x1xi1>
    %cst_25 = arith.constant 0xFF800000 : f32
    %91 = vector.shape_cast %90 : vector<1x16x1xi1> to vector<1x16x1xi1>
    %92 = vector.broadcast %91 : vector<1x16x1xi1> to vector<4x16x4xi1>
    %93 = vector.broadcast %cst_25 : f32 to vector<4x16x4xf32>
    %94 = arith.select %92, %63, %93 : vector<4x16x4xi1>, vector<4x16x4xf32>
    %cst_26 = arith.constant dense<0xFF800000> : vector<4x4xf32>
    %95 = vector.multi_reduction <maximumf>, %94, %cst_26 [1] : vector<4x16x4xf32> to vector<4x4xf32>
    %c0_27 = arith.constant 0 : index
    %c1_28 = arith.constant 1 : index
    %c0_29 = arith.constant 0 : index
    %c0_30 = arith.constant 0 : index
    %96 = vector.load %arg8[%c0_27, %c1_28, %c0_29, %c0_30] : memref<1x4x4x4xf32, #tpu.memory_space<vmem>>, vector<1x1x4x4xf32>
    %97 = vector.shape_cast %96 : vector<1x1x4x4xf32> to vector<4x4xf32>
    %98 = vector.shape_cast %95 : vector<4x4xf32> to vector<1x1x4x4xf32>
    tpu.vector_store %arg8[%c0_27, %c1_28, %c0_29, %c0_30], %98 {strides = array<i32>} : memref<1x4x4x4xf32, #tpu.memory_space<vmem>>, vector<1x1x4x4xf32>,
    %c2_31 = arith.constant 2 : index
    %99 = arith.index_cast %arg0 : i32 to index
    %100 = memref.load %arg3[%c2_31, %99] : memref<4x3xi32, #tpu.memory_space<smem>>
    %c2_32 = arith.constant 2 : index
    %101 = arith.index_cast %arg0 : i32 to index
    %102 = memref.load %arg4[%c2_32, %101] : memref<4x3xi32, #tpu.memory_space<smem>>
    %103 = vector.broadcast %100 : i32 to vector<1x16x1xi32>
    %104 = arith.cmpi sge, %64, %103 : vector<1x16x1xi32>
    %105 = vector.broadcast %102 : i32 to vector<1x16x1xi32>
    %106 = arith.cmpi slt, %64, %105 : vector<1x16x1xi32>
    %107 = arith.andi %104, %106 : vector<1x16x1xi1>
    %cst_33 = arith.constant 0xFF800000 : f32
    %108 = vector.shape_cast %107 : vector<1x16x1xi1> to vector<1x16x1xi1>
    %109 = vector.broadcast %108 : vector<1x16x1xi1> to vector<4x16x4xi1>
    %110 = vector.broadcast %cst_33 : f32 to vector<4x16x4xf32>
    %111 = arith.select %109, %63, %110 : vector<4x16x4xi1>, vector<4x16x4xf32>
    %cst_34 = arith.constant dense<0xFF800000> : vector<4x4xf32>
    %112 = vector.multi_reduction <maximumf>, %111, %cst_34 [1] : vector<4x16x4xf32> to vector<4x4xf32>
    %c0_35 = arith.constant 0 : index
    %c2_36 = arith.constant 2 : index
    %c0_37 = arith.constant 0 : index
    %c0_38 = arith.constant 0 : index
    %113 = vector.load %arg8[%c0_35, %c2_36, %c0_37, %c0_38] : memref<1x4x4x4xf32, #tpu.memory_space<vmem>>, vector<1x1x4x4xf32>
    %114 = vector.shape_cast %113 : vector<1x1x4x4xf32> to vector<4x4xf32>
    %115 = vector.shape_cast %112 : vector<4x4xf32> to vector<1x1x4x4xf32>
    tpu.vector_store %arg8[%c0_35, %c2_36, %c0_37, %c0_38], %115 {strides = array<i32>} : memref<1x4x4x4xf32, #tpu.memory_space<vmem>>, vector<1x1x4x4xf32>,
    %c3_39 = arith.constant 3 : index
    %116 = arith.index_cast %arg0 : i32 to index
    %117 = memref.load %arg3[%c3_39, %116] : memref<4x3xi32, #tpu.memory_space<smem>>
    %c3_40 = arith.constant 3 : index
    %118 = arith.index_cast %arg0 : i32 to index
    %119 = memref.load %arg4[%c3_40, %118] : memref<4x3xi32, #tpu.memory_space<smem>>
    %120 = vector.broadcast %117 : i32 to vector<1x16x1xi32>
    %121 = arith.cmpi sge, %64, %120 : vector<1x16x1xi32>
    %122 = vector.broadcast %119 : i32 to vector<1x16x1xi32>
    %123 = arith.cmpi slt, %64, %122 : vector<1x16x1xi32>
    %124 = arith.andi %121, %123 : vector<1x16x1xi1>
    %cst_41 = arith.constant 0xFF800000 : f32
    %125 = vector.shape_cast %124 : vector<1x16x1xi1> to vector<1x16x1xi1>
    %126 = vector.broadcast %125 : vector<1x16x1xi1> to vector<4x16x4xi1>
    %127 = vector.broadcast %cst_41 : f32 to vector<4x16x4xf32>
    %128 = arith.select %126, %63, %127 : vector<4x16x4xi1>, vector<4x16x4xf32>
    %cst_42 = arith.constant dense<0xFF800000> : vector<4x4xf32>
    %129 = vector.multi_reduction <maximumf>, %128, %cst_42 [1] : vector<4x16x4xf32> to vector<4x4xf32>
    %c0_43 = arith.constant 0 : index
    %c3_44 = arith.constant 3 : index
    %c0_45 = arith.constant 0 : index
    %c0_46 = arith.constant 0 : index
    %130 = vector.load %arg8[%c0_43, %c3_44, %c0_45, %c0_46] : memref<1x4x4x4xf32, #tpu.memory_space<vmem>>, vector<1x1x4x4xf32>
    %131 = vector.shape_cast %130 : vector<1x1x4x4xf32> to vector<4x4xf32>
    %132 = vector.shape_cast %129 : vector<4x4xf32> to vector<1x1x4x4xf32>
    tpu.vector_store %arg8[%c0_43, %c3_44, %c0_45, %c0_46], %132 {strides = array<i32>} : memref<1x4x4x4xf32, #tpu.memory_space<vmem>>, vector<1x1x4x4xf32>,
    return
  }
  func.func @transform_0(%arg0: i32, %arg1: memref<3xi32, #tpu.memory_space<smem>>, %arg2: memref<3xi32, #tpu.memory_space<smem>>, %arg3: memref<4x3xi32, #tpu.memory_space<smem>>, %arg4: memref<4x3xi32, #tpu.memory_space<smem>>, %arg5: memref<4x3xi32, #tpu.memory_space<smem>>, %arg6: memref<4x3xi32, #tpu.memory_space<smem>>) -> (i32, i32, i32, i32) {
    %0 = arith.index_cast %arg0 : i32 to index
    %1 = memref.load %arg1[%0] : memref<3xi32, #tpu.memory_space<smem>>
    %c0_i32 = arith.constant 0 : i32
    %c0_i32_0 = arith.constant 0 : i32
    %c0_i32_1 = arith.constant 0 : i32
    %c0_i32_2 = arith.constant 0 : i32
    return %1, %c0_i32, %c0_i32_0, %c0_i32_1 : i32, i32, i32, i32
  }
  func.func @transform_1(%arg0: i32, %arg1: memref<3xi32, #tpu.memory_space<smem>>, %arg2: memref<3xi32, #tpu.memory_space<smem>>, %arg3: memref<4x3xi32, #tpu.memory_space<smem>>, %arg4: memref<4x3xi32, #tpu.memory_space<smem>>, %arg5: memref<4x3xi32, #tpu.memory_space<smem>>, %arg6: memref<4x3xi32, #tpu.memory_space<smem>>) -> (i32, i32, i32, i32) {
    %0 = arith.index_cast %arg0 : i32 to index
    %1 = memref.load %arg2[%0] : memref<3xi32, #tpu.memory_space<smem>>
    %c0_i32 = arith.constant 0 : i32
    %c0_i32_0 = arith.constant 0 : i32
    %c0_i32_1 = arith.constant 0 : i32
    %c0_i32_2 = arith.constant 0 : i32
    return %1, %c0_i32, %c0_i32_0, %c0_i32_1 : i32, i32, i32, i32
  }
}

</mosaic_0001>

<llo_original>
// kernel: tpu_custom_call.1
$region0: #{tpu_custom_call.1}
  #allocation0 [shape = 'u32[]', space=smem, size = 0x4, offset = 0x4, fixed_abs, tag = 'smem constant byte address 0x4 - core index']
  #allocation1 [shape = 'u32[144,128]{1,0:T(1,128)}', space=vmem, size = 0x12000, scoped, tag = 'internal scratch']
  #allocation2 [shape = 's32[1]{0}', space=sflag, size = 0x4, scoped, tag = 'scoped memory for tpu_custom_call.1']
  #allocation3 [shape = 'u8[512]{0}', space=smem, size = 0x200, scoped, tag = 'prefetched SMEM operand 0']
  #allocation4 [shape = 'u8[512]{0}', space=smem, size = 0x200, scoped, tag = 'prefetched SMEM operand 1']
  #allocation5 [shape = 'u8[2048]{0}', space=smem, size = 0x800, scoped, tag = 'prefetched SMEM operand 2']
  #allocation6 [shape = 'u8[2048]{0}', space=smem, size = 0x800, scoped, tag = 'prefetched SMEM operand 3']
  #allocation7 [shape = 'u8[2048]{0}', space=smem, size = 0x800, scoped, tag = 'prefetched SMEM operand 4']
  #allocation8 [shape = 'u8[2048]{0}', space=smem, size = 0x800, scoped, tag = 'prefetched SMEM operand 5']
  %s0 = inlined_call_operand.vmem [shape: s32[3], index: 0, kind: input, shape index: {}]
  %s1 = inlined_call_operand.vmem [shape: s32[3], index: 1, kind: input, shape index: {}]
  %s2 = inlined_call_operand.vmem [shape: s32[4,3], index: 2, kind: input, shape index: {}]
  %s3 = inlined_call_operand.vmem [shape: s32[4,3], index: 3, kind: input, shape index: {}]
  %s4 = inlined_call_operand.vmem [shape: s32[4,3], index: 4, kind: input, shape index: {}]
  %s5 = inlined_call_operand.vmem [shape: s32[4,3], index: 5, kind: input, shape index: {}]
  %s6 = inlined_call_operand.vmem [shape: f32[2,16,16,4], index: 6, kind: input, shape index: {}]
  %s7 = inlined_call_operand.hbm [shape: f32[3,4,4,4], index: 7, kind: output, shape index: {}]
  %s8 = sld [smem:[#allocation0]]
  $region37: #{tpu_custom_call.1} parent=0
    _
  %s10 = ssub.s32 1, %s8
  %s11 = scalar_select 0, %s10, %s8
  %s12 = sshll.u32 %s0, 4
  %s13 = int_to_ptr.vmem [resolvable:$true] %s12
  %15 = dma.vmem_to_smem %s13, 16, [#allocation3], [#allocation2]
  %s16 = sshll.u32 %s1, 4
  %s17 = int_to_ptr.vmem [resolvable:$true] %s16
  %19 = dma.vmem_to_smem %s17, 16, [#allocation4], [#allocation2]
  %s20 = sshll.u32 %s2, 4
  %s21 = int_to_ptr.vmem [resolvable:$true] %s20
  %23 = dma.vmem_to_smem %s21, 64, [#allocation5], [#allocation2]
  %s24 = sshll.u32 %s3, 4
  %s25 = int_to_ptr.vmem [resolvable:$true] %s24
  %27 = dma.vmem_to_smem %s25, 64, [#allocation6], [#allocation2]
  %s28 = sshll.u32 %s4, 4
  %s29 = int_to_ptr.vmem [resolvable:$true] %s28
  %31 = dma.vmem_to_smem %s29, 64, [#allocation7], [#allocation2]
  %s32 = sshll.u32 %s5, 4
  %s33 = int_to_ptr.vmem [resolvable:$true] %s32
  %35 = dma.vmem_to_smem %s33, 64, [#allocation8], [#allocation2]
  %36 = dma.done [#allocation2], 288
  %37 = sfence
  $region1: #{tpu_custom_call.1} parent=0
    #allocation9 [shape = 'u8[16384]{0}', space=vmem, size = 0x4000, scoped, tag = 'output window, operand 0']
    #allocation10 [shape = 's32[2]{0}', space=sflag, size = 0x8, scoped, tag = 'scoped memory for tpu_custom_call.1']
    %38 = vsyncpa [#allocation10], 0
    %s39 = scalar_lea.sflag [#allocation10], 1
    %40 = vsyncpa %s39, 0
    loop: start=0, step=1, limit=5
    $region2: #{tpu_custom_call.1} parent=1 // loop_pre_header
      _
    $region3: #{tpu_custom_call.1} parent=1 // loop_header
      %s42 = sphi 0, %s46
      %p43 = scmp.ge.s32.totalorder %s42, 5
      %s54 = sphi 0, %s56
      %s57 = sphi 0, %s54
      %s58 = sphi 0, %s57
      %s74 = sphi 0, %s58
      %s82 = sphi 0, %s84
      %s85 = sphi 0, %s82
      %s86 = sphi 0, %s85
      %s102 = sphi 0, %s86
    $region4: #{tpu_custom_call.1} parent=1 // loop_header_branch
      %45 = sbr.rel (%p43) target = $region8
    $region5: #{tpu_custom_call.1} parent=1 // loop_body
      %s47 = ssub.s32 %s42, 1
      %s48 = ssub.s32 %s42, 2
      %s49 = sadd.s32 %s42, 1
      %s50 = sld [smem:[#allocation3 + %s42]]
      %s51 = sld [smem:[#allocation3 + %s49]]
      %s52 = ssub.s32 %s50, %s51
      %p53 = scmp.eq.s32.totalorder %s52, 0
      %s55 = sadd.s32 %s54, 1
      %s56 = scalar_select %p53, %s54, %s55
      %p59 = pneg %p53
      %p60 = scmp.eq.s32.totalorder %s42, 2
      %p61 = por %p59, %p60
      %p62 = scmp.ne.s32.totalorder %s54, %s57
      %p63 = scmp.eq.s32.totalorder %s42, 0
      %p64 = por %p62, %p63
      %p65 = scmp.ne.s32.totalorder %s54, %s57
      %p66 = scmp.eq.s32.totalorder %s47, 2
      %p67 = por %p65, %p66
      %p68 = scmp.ne.s32.totalorder %s57, %s58
      %p69 = scmp.eq.s32.totalorder %s47, 0
      %p70 = por %p68, %p69
      %p71 = scmp.ne.s32.totalorder %s57, %s58
      %p72 = scmp.eq.s32.totalorder %s48, 2
      %p73 = por %p71, %p72
      %p75 = scmp.ne.s32.totalorder %s58, %s74
      %p76 = scmp.eq.s32.totalorder %s48, 0
      %p77 = por %p75, %p76
      %s78 = sld [smem:[#allocation4 + %s42]]
      %s79 = sld [smem:[#allocation4 + %s49]]
      %s80 = ssub.s32 %s78, %s79
      %p81 = scmp.eq.s32.totalorder %s80, 0
      %s83 = sadd.s32 %s82, 1
      %s84 = scalar_select %p81, %s82, %s83
      %p87 = pneg %p81
      %p88 = scmp.eq.s32.totalorder %s42, 2
      %p89 = por %p87, %p88
      %p90 = scmp.ne.s32.totalorder %s82, %s85
      %p91 = scmp.eq.s32.totalorder %s42, 0
      %p92 = por %p90, %p91
      %p93 = scmp.ne.s32.totalorder %s82, %s85
      %p94 = scmp.eq.s32.totalorder %s47, 2
      %p95 = por %p93, %p94
      %p96 = scmp.ne.s32.totalorder %s85, %s86
      %p97 = scmp.eq.s32.totalorder %s47, 0
      %p98 = por %p96, %p97
      %p99 = scmp.ne.s32.totalorder %s85, %s86
      %p100 = scmp.eq.s32.totalorder %s48, 2
      %p101 = por %p99, %p100
      %p103 = scmp.ne.s32.totalorder %s86, %s102
      %p104 = scmp.eq.s32.totalorder %s48, 0
      %p105 = por %p103, %p104
      %p106 = scmp.le.s32.totalorder 1, %s42
      %p107 = scmp.lt.s32.totalorder %s42, 4
      %p108 = pnand %p106, %p107
      %p109 = pneg %p108
      // Predicated region
      $region9: #{tpu_custom_call.1} parent=5 // pred_check
        _
      $region10: #{tpu_custom_call.1} parent=5 // pred_check_branch
        %111 = sbr.rel (%p108) target = $region12
      $region11: #{tpu_custom_call.1} parent=5 // pred_region
        %s112 = ssub.s32 %s42, 1
      $region12: #{tpu_custom_call.1} parent=5 // pred_fallthru
        _
      %p113 = scmp.lt.s32.totalorder %s42, 3
      // Predicated region
      $region13: #{tpu_custom_call.1} parent=5 // pred_check
        %p114 = pneg %p113
      $region14: #{tpu_custom_call.1} parent=5 // pred_check_branch
        %116 = sbr.rel (%p114) target = $region16
      $region15: #{tpu_custom_call.1} parent=5 // pred_region
        // Predicated region
        $region17: #{tpu_custom_call.1} parent=15 // pred_check
          %p117 = pneg %p64
        $region18: #{tpu_custom_call.1} parent=15 // pred_check_branch
          %119 = sbr.rel (%p117) target = $region20
        $region19: #{tpu_custom_call.1} parent=15 // pred_region
          %s120 = sld [smem:[#allocation3 + %s42]]
          %p121 = scmp.lt.s32.totalorder %s120, 1
          %s122 = scalar_select %p121, %s120, 1
          %s123 = smul.addr %s122, 32
          %s124 = smul.addr %s123, 8
          %s125 = scalar_lea.vmem %s6, %s124
          %s126 = sld [smem:[#allocation3 + %s42]]
        $region20: #{tpu_custom_call.1} parent=15 // pred_fallthru
          _
      $region16: #{tpu_custom_call.1} parent=5 // pred_fallthru
        _
      %p127 = scmp.le.s32.totalorder 1, %s42
      %p128 = scmp.lt.s32.totalorder %s42, 4
      %p129 = pnand %p127, %p128
      %p130 = pneg %p129
      // Predicated region
      $region21: #{tpu_custom_call.1} parent=5 // pred_check
        _
      $region22: #{tpu_custom_call.1} parent=5 // pred_check_branch
        %132 = sbr.rel (%p129) target = $region24
      $region23: #{tpu_custom_call.1} parent=5 // pred_region
        %s133 = ssub.s32 %s42, 1
        %s134 = sld [smem:[#allocation3 + %s47]]
        %p135 = scmp.lt.s32.totalorder %s134, 1
        %s136 = scalar_select %p135, %s134, 1
        %s137 = smul.addr %s136, 32
        %s138 = smul.addr %s137, 8
        %s139 = scalar_lea.vmem %s6, %s138
        %p140 = pneg %p70
        %p141 = pneg %p67
        %p142 = pneg %p98
        %p143 = pneg %p95
        %s144 = sand.u32 %s85, 1
        %s145 = scalar_lea.sflag [#allocation10], %s144
        %s146 = sand.u32 %s85, 1
        %s147 = smul.addr %s146, 16
        %s148 = scalar_lea.vmem [#allocation9], %s147
        %s149 = sld [smem:[#allocation3 + %s47]]
        %p150 = scmp.lt.s32.totalorder %s149, 1
        %s151 = scalar_select %p150, %s149, 1
        %s152 = smul.addr %s151, 32
        %s153 = smul.addr %s152, 8
        %s154 = scalar_lea.vmem %s6, %s153
        %s155 = sld [smem:[#allocation3 + %s47]]
        %s156 = sld [smem:[#allocation4 + %s47]]
        %v157 = vld [vmem:[%s154] sm:$0xff]
        %v158 = vld [vmem:[%s154 + $0x8] sm:$0xff]
        %v159 = vld [vmem:[%s154 + $0x10] sm:$0xff]
        %v160 = vld [vmem:[%s154 + $0x18] sm:$0xff]
        %v161 = vld [vmem:[%s154 + $0x20] sm:$0xff]
        %v162 = vld [vmem:[%s154 + $0x28] sm:$0xff]
        %v163 = vld [vmem:[%s154 + $0x30] sm:$0xff]
        %v164 = vld [vmem:[%s154 + $0x38] sm:$0xff]
        %v165 = vld [vmem:[%s154 + $0x40] sm:$0xff]
        %v166 = vld [vmem:[%s154 + $0x48] sm:$0xff]
        %v167 = vld [vmem:[%s154 + $0x50] sm:$0xff]
        %v168 = vld [vmem:[%s154 + $0x58] sm:$0xff]
        %v169 = vld [vmem:[%s154 + $0x60] sm:$0xff]
        %v170 = vld [vmem:[%s154 + $0x68] sm:$0xff]
        %v171 = vld [vmem:[%s154 + $0x70] sm:$0xff]
        %v172 = vld [vmem:[%s154 + $0x78] sm:$0xff]
        %v173 = vld [vmem:[%s154 + $0x80] sm:$0xff]
        %v174 = vld [vmem:[%s154 + $0x88] sm:$0xff]
        %v175 = vld [vmem:[%s154 + $0x90] sm:$0xff]
        %v176 = vld [vmem:[%s154 + $0x98] sm:$0xff]
        %v177 = vld [vmem:[%s154 + $0xa0] sm:$0xff]
        %v178 = vld [vmem:[%s154 + $0xa8] sm:$0xff]
        %v179 = vld [vmem:[%s154 + $0xb0] sm:$0xff]
        %v180 = vld [vmem:[%s154 + $0xb8] sm:$0xff]
        %v181 = vld [vmem:[%s154 + $0xc0] sm:$0xff]
        %v182 = vld [vmem:[%s154 + $0xc8] sm:$0xff]
        %v183 = vld [vmem:[%s154 + $0xd0] sm:$0xff]
        %v184 = vld [vmem:[%s154 + $0xd8] sm:$0xff]
        %v185 = vld [vmem:[%s154 + $0xe0] sm:$0xff]
        %v186 = vld [vmem:[%s154 + $0xe8] sm:$0xff]
        %v187 = vld [vmem:[%s154 + $0xf0] sm:$0xff]
        %v188 = vld [vmem:[%s154 + $0xf8] sm:$0xff]
        %v189 = vlaneseq
        %v190 = vshrl.u32 %v189, 7
        %v191 = vadd.s32 %v190, 8
        %s192 = sld [smem:[#allocation7 + %s47]]
        %s193 = sld [smem:[#allocation8 + %s47]]
        %v194 = vstv %s192
        %vm195 = vcmp.ge.s32.totalorder %v190, %v194
        %vm196 = vcmp.ge.s32.totalorder %v191, %v194
        %v197 = vstv %s193
        %vm198 = vcmp.lt.s32.totalorder %v190, %v197
        %vm199 = vcmp.lt.s32.totalorder %v191, %v197
        %vm200 = vmand %vm195, %vm198
        %vm201 = vmand %vm196, %vm199
        %v202 = vsel %vm200, 1, 0
        %v203 = vsel %vm201, 1, 0
        %vm204 = vcmp.eq.s32.totalorder %v202, 1
        %vm205 = vcmp.eq.s32.totalorder %v203, 1
        %v206 = vsel %vm204, %v157, -inf
        %v207 = vsel %vm205, %v158, -inf
        %v208 = vsel %vm204, %v159, -inf
        %v209 = vsel %vm205, %v160, -inf
        %v210 = vsel %vm204, %v161, -inf
        %v211 = vsel %vm205, %v162, -inf
        %v212 = vsel %vm204, %v163, -inf
        %v213 = vsel %vm205, %v164, -inf
        %v214 = vsel %vm204, %v165, -inf
        %v215 = vsel %vm205, %v166, -inf
        %v216 = vsel %vm204, %v167, -inf
        %v217 = vsel %vm205, %v168, -inf
        %v218 = vsel %vm204, %v169, -inf
        %v219 = vsel %vm205, %v170, -inf
        %v220 = vsel %vm204, %v171, -inf
        %v221 = vsel %vm205, %v172, -inf
        %v222 = vsel %vm204, %v173, -inf
        %v223 = vsel %vm205, %v174, -inf
        %v224 = vsel %vm204, %v175, -inf
        %v225 = vsel %vm205, %v176, -inf
        %v226 = vsel %vm204, %v177, -inf
        %v227 = vsel %vm205, %v178, -inf
        %v228 = vsel %vm204, %v179, -inf
        %v229 = vsel %vm205, %v180, -inf
        %v230 = vsel %vm204, %v181, -inf
        %v231 = vsel %vm205, %v182, -inf
        %v232 = vsel %vm204, %v183, -inf
        %v233 = vsel %vm205, %v184, -inf
        %v234 = vsel %vm204, %v185, -inf
        %v235 = vsel %vm205, %v186, -inf
        %v236 = vsel %vm204, %v187, -inf
        %v237 = vsel %vm205, %v188, -inf
        %vm238 = vcmask 31744
        %v239 = vsel %vm238, %v206, -inf
        %v240 = vsel %vm238, %v207, -inf
        %v241 = vmax.f32 %v239, %v240
        %v242 = vrot.slane %v241, 4
        %v243 = vmax.f32 %v241, %v242
        %v244 = vrot.slane %v243, 2
        %v245 = vmax.f32 %v243, %v244
        %v246 = vrot.slane %v245, 1
        %v247 = vmax.f32 %v245, %v246
        %v248 = vsel %vm238, %v208, -inf
        %v249 = vsel %vm238, %v209, -inf
        %v250 = vmax.f32 %v248, %v249
        %v251 = vrot.slane %v250, 4
        %v252 = vmax.f32 %v250, %v251
        %v253 = vrot.slane %v252, 2
        %v254 = vmax.f32 %v252, %v253
        %v255 = vrot.slane %v254, 1
        %v256 = vmax.f32 %v254, %v255
        %v257 = vsel %vm238, %v210, -inf
        %v258 = vsel %vm238, %v211, -inf
        %v259 = vmax.f32 %v257, %v258
        %v260 = vrot.slane %v259, 4
        %v261 = vmax.f32 %v259, %v260
        %v262 = vrot.slane %v261, 2
        %v263 = vmax.f32 %v261, %v262
        %v264 = vrot.slane %v263, 1
        %v265 = vmax.f32 %v263, %v264
        %v266 = vsel %vm238, %v212, -inf
        %v267 = vsel %vm238, %v213, -inf
        %v268 = vmax.f32 %v266, %v267
        %v269 = vrot.slane %v268, 4
        %v270 = vmax.f32 %v268, %v269
        %v271 = vrot.slane %v270, 2
        %v272 = vmax.f32 %v270, %v271
        %v273 = vrot.slane %v272, 1
        %v274 = vmax.f32 %v272, %v273
        %v275 = vsel %vm238, %v214, -inf
        %v276 = vsel %vm238, %v215, -inf
        %v277 = vmax.f32 %v275, %v276
        %v278 = vrot.slane %v277, 4
        %v279 = vmax.f32 %v277, %v278
        %v280 = vrot.slane %v279, 2
        %v281 = vmax.f32 %v279, %v280
        %v282 = vrot.slane %v281, 1
        %v283 = vmax.f32 %v281, %v282
        %v284 = vsel %vm238, %v216, -inf
        %v285 = vsel %vm238, %v217, -inf
        %v286 = vmax.f32 %v284, %v285
        %v287 = vrot.slane %v286, 4
        %v288 = vmax.f32 %v286, %v287
        %v289 = vrot.slane %v288, 2
        %v290 = vmax.f32 %v288, %v289
        %v291 = vrot.slane %v290, 1
        %v292 = vmax.f32 %v290, %v291
        %v293 = vsel %vm238, %v218, -inf
        %v294 = vsel %vm238, %v219, -inf
        %v295 = vmax.f32 %v293, %v294
        %v296 = vrot.slane %v295, 4
        %v297 = vmax.f32 %v295, %v296
        %v298 = vrot.slane %v297, 2
        %v299 = vmax.f32 %v297, %v298
        %v300 = vrot.slane %v299, 1
        %v301 = vmax.f32 %v299, %v300
        %v302 = vsel %vm238, %v220, -inf
        %v303 = vsel %vm238, %v221, -inf
        %v304 = vmax.f32 %v302, %v303
        %v305 = vrot.slane %v304, 4
        %v306 = vmax.f32 %v304, %v305
        %v307 = vrot.slane %v306, 2
        %v308 = vmax.f32 %v306, %v307
        %v309 = vrot.slane %v308, 1
        %v310 = vmax.f32 %v308, %v309
        %v311 = vsel %vm238, %v222, -inf
        %v312 = vsel %vm238, %v223, -inf
        %v313 = vmax.f32 %v311, %v312
        %v314 = vrot.slane %v313, 4
        %v315 = vmax.f32 %v313, %v314
        %v316 = vrot.slane %v315, 2
        %v317 = vmax.f32 %v315, %v316
        %v318 = vrot.slane %v317, 1
        %v319 = vmax.f32 %v317, %v318
        %v320 = vsel %vm238, %v224, -inf
        %v321 = vsel %vm238, %v225, -inf
        %v322 = vmax.f32 %v320, %v321
        %v323 = vrot.slane %v322, 4
        %v324 = vmax.f32 %v322, %v323
        %v325 = vrot.slane %v324, 2
        %v326 = vmax.f32 %v324, %v325
        %v327 = vrot.slane %v326, 1
        %v328 = vmax.f32 %v326, %v327
        %v329 = vsel %vm238, %v226, -inf
        %v330 = vsel %vm238, %v227, -inf
        %v331 = vmax.f32 %v329, %v330
        %v332 = vrot.slane %v331, 4
        %v333 = vmax.f32 %v331, %v332
        %v334 = vrot.slane %v333, 2
        %v335 = vmax.f32 %v333, %v334
        %v336 = vrot.slane %v335, 1
        %v337 = vmax.f32 %v335, %v336
        %v338 = vsel %vm238, %v228, -inf
        %v339 = vsel %vm238, %v229, -inf
        %v340 = vmax.f32 %v338, %v339
        %v341 = vrot.slane %v340, 4
        %v342 = vmax.f32 %v340, %v341
        %v343 = vrot.slane %v342, 2
        %v344 = vmax.f32 %v342, %v343
        %v345 = vrot.slane %v344, 1
        %v346 = vmax.f32 %v344, %v345
        %v347 = vsel %vm238, %v230, -inf
        %v348 = vsel %vm238, %v231, -inf
        %v349 = vmax.f32 %v347, %v348
        %v350 = vrot.slane %v349, 4
        %v351 = vmax.f32 %v349, %v350
        %v352 = vrot.slane %v351, 2
        %v353 = vmax.f32 %v351, %v352
        %v354 = vrot.slane %v353, 1
        %v355 = vmax.f32 %v353, %v354
        %v356 = vsel %vm238, %v232, -inf
        %v357 = vsel %vm238, %v233, -inf
        %v358 = vmax.f32 %v356, %v357
        %v359 = vrot.slane %v358, 4
        %v360 = vmax.f32 %v358, %v359
        %v361 = vrot.slane %v360, 2
        %v362 = vmax.f32 %v360, %v361
        %v363 = vrot.slane %v362, 1
        %v364 = vmax.f32 %v362, %v363
        %v365 = vsel %vm238, %v234, -inf
        %v366 = vsel %vm238, %v235, -inf
        %v367 = vmax.f32 %v365, %v366
        %v368 = vrot.slane %v367, 4
        %v369 = vmax.f32 %v367, %v368
        %v370 = vrot.slane %v369, 2
        %v371 = vmax.f32 %v369, %v370
        %v372 = vrot.slane %v371, 1
        %v373 = vmax.f32 %v371, %v372
        %v374 = vsel %vm238, %v236, -inf
        %v375 = vsel %vm238, %v237, -inf
        %v376 = vmax.f32 %v374, %v375
        %v377 = vrot.slane %v376, 4
        %v378 = vmax.f32 %v376, %v377
        %v379 = vrot.slane %v378, 2
        %v380 = vmax.f32 %v378, %v379
        %v381 = vrot.slane %v380, 1
        %v382 = vmax.f32 %v380, %v381
        %s383 = sshra.s32 %s47, 7
        %s384 = sand.u32 %s47, 127
        %s385 = sadd.s32 %s383, 1
        %s386 = smul.u32 %s385, 128
        %s387 = sshra.s32 %s47, 7
        %s388 = sand.u32 %s47, 127
        %s389 = sadd.s32 %s386, %s388
        %s390 = sld [smem:[#allocation7 + %s389]]
        %s391 = sld [smem:[#allocation8 + %s389]]
        %v392 = vstv %s390
        %vm393 = vcmp.ge.s32.totalorder %v190, %v392
        %vm394 = vcmp.ge.s32.totalorder %v191, %v392
        %v395 = vstv %s391
        %vm396 = vcmp.lt.s32.totalorder %v190, %v395
        %vm397 = vcmp.lt.s32.totalorder %v191, %v395
        %vm398 = vmand %vm393, %vm396
        %vm399 = vmand %vm394, %vm397
        %v400 = vsel %vm398, 1, 0
        %v401 = vsel %vm399, 1, 0
        %vm402 = vcmp.eq.s32.totalorder %v400, 1
        %vm403 = vcmp.eq.s32.totalorder %v401, 1
        %v404 = vsel %vm402, %v157, -inf
        %v405 = vsel %vm403, %v158, -inf
        %v406 = vsel %vm402, %v159, -inf
        %v407 = vsel %vm403, %v160, -inf
        %v408 = vsel %vm402, %v161, -inf
        %v409 = vsel %vm403, %v162, -inf
        %v410 = vsel %vm402, %v163, -inf
        %v411 = vsel %vm403, %v164, -inf
        %v412 = vsel %vm402, %v165, -inf
        %v413 = vsel %vm403, %v166, -inf
        %v414 = vsel %vm402, %v167, -inf
        %v415 = vsel %vm403, %v168, -inf
        %v416 = vsel %vm402, %v169, -inf
        %v417 = vsel %vm403, %v170, -inf
        %v418 = vsel %vm402, %v171, -inf
        %v419 = vsel %vm403, %v172, -inf
        %v420 = vsel %vm402, %v173, -inf
        %v421 = vsel %vm403, %v174, -inf
        %v422 = vsel %vm402, %v175, -inf
        %v423 = vsel %vm403, %v176, -inf
        %v424 = vsel %vm402, %v177, -inf
        %v425 = vsel %vm403, %v178, -inf
        %v426 = vsel %vm402, %v179, -inf
        %v427 = vsel %vm403, %v180, -inf
        %v428 = vsel %vm402, %v181, -inf
        %v429 = vsel %vm403, %v182, -inf
        %v430 = vsel %vm402, %v183, -inf
        %v431 = vsel %vm403, %v184, -inf
        %v432 = vsel %vm402, %v185, -inf
        %v433 = vsel %vm403, %v186, -inf
        %v434 = vsel %vm402, %v187, -inf
        %v435 = vsel %vm403, %v188, -inf
        %v436 = vsel %vm238, %v404, -inf
        %v437 = vsel %vm238, %v405, -inf
        %v438 = vmax.f32 %v436, %v437
        %v439 = vrot.slane %v438, 4
        %v440 = vmax.f32 %v438, %v439
        %v441 = vrot.slane %v440, 2
        %v442 = vmax.f32 %v440, %v441
        %v443 = vrot.slane %v442, 1
        %v444 = vmax.f32 %v442, %v443
        %v445 = vsel %vm238, %v406, -inf
        %v446 = vsel %vm238, %v407, -inf
        %v447 = vmax.f32 %v445, %v446
        %v448 = vrot.slane %v447, 4
        %v449 = vmax.f32 %v447, %v448
        %v450 = vrot.slane %v449, 2
        %v451 = vmax.f32 %v449, %v450
        %v452 = vrot.slane %v451, 1
        %v453 = vmax.f32 %v451, %v452
        %v454 = vsel %vm238, %v408, -inf
        %v455 = vsel %vm238, %v409, -inf
        %v456 = vmax.f32 %v454, %v455
        %v457 = vrot.slane %v456, 4
        %v458 = vmax.f32 %v456, %v457
        %v459 = vrot.slane %v458, 2
        %v460 = vmax.f32 %v458, %v459
        %v461 = vrot.slane %v460, 1
        %v462 = vmax.f32 %v460, %v461
        %v463 = vsel %vm238, %v410, -inf
        %v464 = vsel %vm238, %v411, -inf
        %v465 = vmax.f32 %v463, %v464
        %v466 = vrot.slane %v465, 4
        %v467 = vmax.f32 %v465, %v466
        %v468 = vrot.slane %v467, 2
        %v469 = vmax.f32 %v467, %v468
        %v470 = vrot.slane %v469, 1
        %v471 = vmax.f32 %v469, %v470
        %v472 = vsel %vm238, %v412, -inf
        %v473 = vsel %vm238, %v413, -inf
        %v474 = vmax.f32 %v472, %v473
        %v475 = vrot.slane %v474, 4
        %v476 = vmax.f32 %v474, %v475
        %v477 = vrot.slane %v476, 2
        %v478 = vmax.f32 %v476, %v477
        %v479 = vrot.slane %v478, 1
        %v480 = vmax.f32 %v478, %v479
        %v481 = vsel %vm238, %v414, -inf
        %v482 = vsel %vm238, %v415, -inf
        %v483 = vmax.f32 %v481, %v482
        %v484 = vrot.slane %v483, 4
        %v485 = vmax.f32 %v483, %v484
        %v486 = vrot.slane %v485, 2
        %v487 = vmax.f32 %v485, %v486
        %v488 = vrot.slane %v487, 1
        %v489 = vmax.f32 %v487, %v488
        %v490 = vsel %vm238, %v416, -inf
        %v491 = vsel %vm238, %v417, -inf
        %v492 = vmax.f32 %v490, %v491
        %v493 = vrot.slane %v492, 4
        %v494 = vmax.f32 %v492, %v493
        %v495 = vrot.slane %v494, 2
        %v496 = vmax.f32 %v494, %v495
        %v497 = vrot.slane %v496, 1
        %v498 = vmax.f32 %v496, %v497
        %v499 = vsel %vm238, %v418, -inf
        %v500 = vsel %vm238, %v419, -inf
        %v501 = vmax.f32 %v499, %v500
        %v502 = vrot.slane %v501, 4
        %v503 = vmax.f32 %v501, %v502
        %v504 = vrot.slane %v503, 2
        %v505 = vmax.f32 %v503, %v504
        %v506 = vrot.slane %v505, 1
        %v507 = vmax.f32 %v505, %v506
        %v508 = vsel %vm238, %v420, -inf
        %v509 = vsel %vm238, %v421, -inf
        %v510 = vmax.f32 %v508, %v509
        %v511 = vrot.slane %v510, 4
        %v512 = vmax.f32 %v510, %v511
        %v513 = vrot.slane %v512, 2
        %v514 = vmax.f32 %v512, %v513
        %v515 = vrot.slane %v514, 1
        %v516 = vmax.f32 %v514, %v515
        %v517 = vsel %vm238, %v422, -inf
        %v518 = vsel %vm238, %v423, -inf
        %v519 = vmax.f32 %v517, %v518
        %v520 = vrot.slane %v519, 4
        %v521 = vmax.f32 %v519, %v520
        %v522 = vrot.slane %v521, 2
        %v523 = vmax.f32 %v521, %v522
        %v524 = vrot.slane %v523, 1
        %v525 = vmax.f32 %v523, %v524
        %v526 = vsel %vm238, %v424, -inf
        %v527 = vsel %vm238, %v425, -inf
        %v528 = vmax.f32 %v526, %v527
        %v529 = vrot.slane %v528, 4
        %v530 = vmax.f32 %v528, %v529
        %v531 = vrot.slane %v530, 2
        %v532 = vmax.f32 %v530, %v531
        %v533 = vrot.slane %v532, 1
        %v534 = vmax.f32 %v532, %v533
        %v535 = vsel %vm238, %v426, -inf
        %v536 = vsel %vm238, %v427, -inf
        %v537 = vmax.f32 %v535, %v536
        %v538 = vrot.slane %v537, 4
        %v539 = vmax.f32 %v537, %v538
        %v540 = vrot.slane %v539, 2
        %v541 = vmax.f32 %v539, %v540
        %v542 = vrot.slane %v541, 1
        %v543 = vmax.f32 %v541, %v542
        %v544 = vsel %vm238, %v428, -inf
        %v545 = vsel %vm238, %v429, -inf
        %v546 = vmax.f32 %v544, %v545
        %v547 = vrot.slane %v546, 4
        %v548 = vmax.f32 %v546, %v547
        %v549 = vrot.slane %v548, 2
        %v550 = vmax.f32 %v548, %v549
        %v551 = vrot.slane %v550, 1
        %v552 = vmax.f32 %v550, %v551
        %v553 = vsel %vm238, %v430, -inf
        %v554 = vsel %vm238, %v431, -inf
        %v555 = vmax.f32 %v553, %v554
        %v556 = vrot.slane %v555, 4
        %v557 = vmax.f32 %v555, %v556
        %v558 = vrot.slane %v557, 2
        %v559 = vmax.f32 %v557, %v558
        %v560 = vrot.slane %v559, 1
        %v561 = vmax.f32 %v559, %v560
        %v562 = vsel %vm238, %v432, -inf
        %v563 = vsel %vm238, %v433, -inf
        %v564 = vmax.f32 %v562, %v563
        %v565 = vrot.slane %v564, 4
        %v566 = vmax.f32 %v564, %v565
        %v567 = vrot.slane %v566, 2
        %v568 = vmax.f32 %v566, %v567
        %v569 = vrot.slane %v568, 1
        %v570 = vmax.f32 %v568, %v569
        %v571 = vsel %vm238, %v434, -inf
        %v572 = vsel %vm238, %v435, -inf
        %v573 = vmax.f32 %v571, %v572
        %v574 = vrot.slane %v573, 4
        %v575 = vmax.f32 %v573, %v574
        %v576 = vrot.slane %v575, 2
        %v577 = vmax.f32 %v575, %v576
        %v578 = vrot.slane %v577, 1
        %v579 = vmax.f32 %v577, %v578
        %s580 = sadd.s32 %s383, 2
        %s581 = smul.u32 %s580, 128
        %s582 = sadd.s32 %s581, %s388
        %s583 = sld [smem:[#allocation7 + %s582]]
        %s584 = sld [smem:[#allocation8 + %s582]]
        %v585 = vstv %s583
        %vm586 = vcmp.ge.s32.totalorder %v190, %v585
        %vm587 = vcmp.ge.s32.totalorder %v191, %v585
        %v588 = vstv %s584
        %vm589 = vcmp.lt.s32.totalorder %v190, %v588
        %vm590 = vcmp.lt.s32.totalorder %v191, %v588
        %vm591 = vmand %vm586, %vm589
        %vm592 = vmand %vm587, %vm590
        %v593 = vsel %vm591, 1, 0
        %v594 = vsel %vm592, 1, 0
        %vm595 = vcmp.eq.s32.totalorder %v593, 1
        %vm596 = vcmp.eq.s32.totalorder %v594, 1
        %v597 = vsel %vm595, %v157, -inf
        %v598 = vsel %vm596, %v158, -inf
        %v599 = vsel %vm595, %v159, -inf
        %v600 = vsel %vm596, %v160, -inf
        %v601 = vsel %vm595, %v161, -inf
        %v602 = vsel %vm596, %v162, -inf
        %v603 = vsel %vm595, %v163, -inf
        %v604 = vsel %vm596, %v164, -inf
        %v605 = vsel %vm595, %v165, -inf
        %v606 = vsel %vm596, %v166, -inf
        %v607 = vsel %vm595, %v167, -inf
        %v608 = vsel %vm596, %v168, -inf
        %v609 = vsel %vm595, %v169, -inf
        %v610 = vsel %vm596, %v170, -inf
        %v611 = vsel %vm595, %v171, -inf
        %v612 = vsel %vm596, %v172, -inf
        %v613 = vsel %vm595, %v173, -inf
        %v614 = vsel %vm596, %v174, -inf
        %v615 = vsel %vm595, %v175, -inf
        %v616 = vsel %vm596, %v176, -inf
        %v617 = vsel %vm595, %v177, -inf
        %v618 = vsel %vm596, %v178, -inf
        %v619 = vsel %vm595, %v179, -inf
        %v620 = vsel %vm596, %v180, -inf
        %v621 = vsel %vm595, %v181, -inf
        %v622 = vsel %vm596, %v182, -inf
        %v623 = vsel %vm595, %v183, -inf
        %v624 = vsel %vm596, %v184, -inf
        %v625 = vsel %vm595, %v185, -inf
        %v626 = vsel %vm596, %v186, -inf
        %v627 = vsel %vm595, %v187, -inf
        %v628 = vsel %vm596, %v188, -inf
        %v629 = vsel %vm238, %v597, -inf
        %v630 = vsel %vm238, %v598, -inf
        %v631 = vmax.f32 %v629, %v630
        %v632 = vrot.slane %v631, 4
        %v633 = vmax.f32 %v631, %v632
        %v634 = vrot.slane %v633, 2
        %v635 = vmax.f32 %v633, %v634
        %v636 = vrot.slane %v635, 1
        %v637 = vmax.f32 %v635, %v636
        %v638 = vsel %vm238, %v599, -inf
        %v639 = vsel %vm238, %v600, -inf
        %v640 = vmax.f32 %v638, %v639
        %v641 = vrot.slane %v640, 4
        %v642 = vmax.f32 %v640, %v641
        %v643 = vrot.slane %v642, 2
        %v644 = vmax.f32 %v642, %v643
        %v645 = vrot.slane %v644, 1
        %v646 = vmax.f32 %v644, %v645
        %v647 = vsel %vm238, %v601, -inf
        %v648 = vsel %vm238, %v602, -inf
        %v649 = vmax.f32 %v647, %v648
        %v650 = vrot.slane %v649, 4
        %v651 = vmax.f32 %v649, %v650
        %v652 = vrot.slane %v651, 2
        %v653 = vmax.f32 %v651, %v652
        %v654 = vrot.slane %v653, 1
        %v655 = vmax.f32 %v653, %v654
        %v656 = vsel %vm238, %v603, -inf
        %v657 = vsel %vm238, %v604, -inf
        %v658 = vmax.f32 %v656, %v657
        %v659 = vrot.slane %v658, 4
        %v660 = vmax.f32 %v658, %v659
        %v661 = vrot.slane %v660, 2
        %v662 = vmax.f32 %v660, %v661
        %v663 = vrot.slane %v662, 1
        %v664 = vmax.f32 %v662, %v663
        %v665 = vsel %vm238, %v605, -inf
        %v666 = vsel %vm238, %v606, -inf
        %v667 = vmax.f32 %v665, %v666
        %v668 = vrot.slane %v667, 4
        %v669 = vmax.f32 %v667, %v668
        %v670 = vrot.slane %v669, 2
        %v671 = vmax.f32 %v669, %v670
        %v672 = vrot.slane %v671, 1
        %v673 = vmax.f32 %v671, %v672
        %v674 = vsel %vm238, %v607, -inf
        %v675 = vsel %vm238, %v608, -inf
        %v676 = vmax.f32 %v674, %v675
        %v677 = vrot.slane %v676, 4
        %v678 = vmax.f32 %v676, %v677
        %v679 = vrot.slane %v678, 2
        %v680 = vmax.f32 %v678, %v679
        %v681 = vrot.slane %v680, 1
        %v682 = vmax.f32 %v680, %v681
        %v683 = vsel %vm238, %v609, -inf
        %v684 = vsel %vm238, %v610, -inf
        %v685 = vmax.f32 %v683, %v684
        %v686 = vrot.slane %v685, 4
        %v687 = vmax.f32 %v685, %v686
        %v688 = vrot.slane %v687, 2
        %v689 = vmax.f32 %v687, %v688
        %v690 = vrot.slane %v689, 1
        %v691 = vmax.f32 %v689, %v690
        %v692 = vsel %vm238, %v611, -inf
        %v693 = vsel %vm238, %v612, -inf
        %v694 = vmax.f32 %v692, %v693
        %v695 = vrot.slane %v694, 4
        %v696 = vmax.f32 %v694, %v695
        %v697 = vrot.slane %v696, 2
        %v698 = vmax.f32 %v696, %v697
        %v699 = vrot.slane %v698, 1
        %v700 = vmax.f32 %v698, %v699
        %v701 = vsel %vm238, %v613, -inf
        %v702 = vsel %vm238, %v614, -inf
        %v703 = vmax.f32 %v701, %v702
        %v704 = vrot.slane %v703, 4
        %v705 = vmax.f32 %v703, %v704
        %v706 = vrot.slane %v705, 2
        %v707 = vmax.f32 %v705, %v706
        %v708 = vrot.slane %v707, 1
        %v709 = vmax.f32 %v707, %v708
        %v710 = vsel %vm238, %v615, -inf
        %v711 = vsel %vm238, %v616, -inf
        %v712 = vmax.f32 %v710, %v711
        %v713 = vrot.slane %v712, 4
        %v714 = vmax.f32 %v712, %v713
        %v715 = vrot.slane %v714, 2
        %v716 = vmax.f32 %v714, %v715
        %v717 = vrot.slane %v716, 1
        %v718 = vmax.f32 %v716, %v717
        %v719 = vsel %vm238, %v617, -inf
        %v720 = vsel %vm238, %v618, -inf
        %v721 = vmax.f32 %v719, %v720
        %v722 = vrot.slane %v721, 4
        %v723 = vmax.f32 %v721, %v722
        %v724 = vrot.slane %v723, 2
        %v725 = vmax.f32 %v723, %v724
        %v726 = vrot.slane %v725, 1
        %v727 = vmax.f32 %v725, %v726
        %v728 = vsel %vm238, %v619, -inf
        %v729 = vsel %vm238, %v620, -inf
        %v730 = vmax.f32 %v728, %v729
        %v731 = vrot.slane %v730, 4
        %v732 = vmax.f32 %v730, %v731
        %v733 = vrot.slane %v732, 2
        %v734 = vmax.f32 %v732, %v733
        %v735 = vrot.slane %v734, 1
        %v736 = vmax.f32 %v734, %v735
        %v737 = vsel %vm238, %v621, -inf
        %v738 = vsel %vm238, %v622, -inf
        %v739 = vmax.f32 %v737, %v738
        %v740 = vrot.slane %v739, 4
        %v741 = vmax.f32 %v739, %v740
        %v742 = vrot.slane %v741, 2
        %v743 = vmax.f32 %v741, %v742
        %v744 = vrot.slane %v743, 1
        %v745 = vmax.f32 %v743, %v744
        %v746 = vsel %vm238, %v623, -inf
        %v747 = vsel %vm238, %v624, -inf
        %v748 = vmax.f32 %v746, %v747
        %v749 = vrot.slane %v748, 4
        %v750 = vmax.f32 %v748, %v749
        %v751 = vrot.slane %v750, 2
        %v752 = vmax.f32 %v750, %v751
        %v753 = vrot.slane %v752, 1
        %v754 = vmax.f32 %v752, %v753
        %v755 = vsel %vm238, %v625, -inf
        %v756 = vsel %vm238, %v626, -inf
        %v757 = vmax.f32 %v755, %v756
        %v758 = vrot.slane %v757, 4
        %v759 = vmax.f32 %v757, %v758
        %v760 = vrot.slane %v759, 2
        %v761 = vmax.f32 %v759, %v760
        %v762 = vrot.slane %v761, 1
        %v763 = vmax.f32 %v761, %v762
        %v764 = vsel %vm238, %v627, -inf
        %v765 = vsel %vm238, %v628, -inf
        %v766 = vmax.f32 %v764, %v765
        %v767 = vrot.slane %v766, 4
        %v768 = vmax.f32 %v766, %v767
        %v769 = vrot.slane %v768, 2
        %v770 = vmax.f32 %v768, %v769
        %v771 = vrot.slane %v770, 1
        %v772 = vmax.f32 %v770, %v771
        %s773 = sadd.s32 %s383, 3
        %s774 = smul.u32 %s773, 128
        %s775 = sadd.s32 %s774, %s388
        %s776 = sld [smem:[#allocation7 + %s775]]
        %s777 = sld [smem:[#allocation8 + %s775]]
        %v778 = vstv %s776
        %vm779 = vcmp.ge.s32.totalorder %v190, %v778
        %vm780 = vcmp.ge.s32.totalorder %v191, %v778
        %v781 = vstv %s777
        %vm782 = vcmp.lt.s32.totalorder %v190, %v781
        %vm783 = vcmp.lt.s32.totalorder %v191, %v781
        %vm784 = vmand %vm779, %vm782
        %vm785 = vmand %vm780, %vm783
        %v786 = vsel %vm784, 1, 0
        %v787 = vsel %vm785, 1, 0
        %vm788 = vcmp.eq.s32.totalorder %v786, 1
        %vm789 = vcmp.eq.s32.totalorder %v787, 1
        %v790 = vsel %vm788, %v157, -inf
        %v791 = vsel %vm789, %v158, -inf
        %v792 = vsel %vm788, %v159, -inf
        %v793 = vsel %vm789, %v160, -inf
        %v794 = vsel %vm788, %v161, -inf
        %v795 = vsel %vm789, %v162, -inf
        %v796 = vsel %vm788, %v163, -inf
        %v797 = vsel %vm789, %v164, -inf
        %v798 = vsel %vm788, %v165, -inf
        %v799 = vsel %vm789, %v166, -inf
        %v800 = vsel %vm788, %v167, -inf
        %v801 = vsel %vm789, %v168, -inf
        %v802 = vsel %vm788, %v169, -inf
        %v803 = vsel %vm789, %v170, -inf
        %v804 = vsel %vm788, %v171, -inf
        %v805 = vsel %vm789, %v172, -inf
        %v806 = vsel %vm788, %v173, -inf
        %v807 = vsel %vm789, %v174, -inf
        %v808 = vsel %vm788, %v175, -inf
        %v809 = vsel %vm789, %v176, -inf
        %v810 = vsel %vm788, %v177, -inf
        %v811 = vsel %vm789, %v178, -inf
        %v812 = vsel %vm788, %v179, -inf
        %v813 = vsel %vm789, %v180, -inf
        %v814 = vsel %vm788, %v181, -inf
        %v815 = vsel %vm789, %v182, -inf
        %v816 = vsel %vm788, %v183, -inf
        %v817 = vsel %vm789, %v184, -inf
        %v818 = vsel %vm788, %v185, -inf
        %v819 = vsel %vm789, %v186, -inf
        %v820 = vsel %vm788, %v187, -inf
        %v821 = vsel %vm789, %v188, -inf
        %v822 = vsel %vm238, %v790, -inf
        %v823 = vsel %vm238, %v791, -inf
        %v824 = vmax.f32 %v822, %v823
        %v825 = vrot.slane %v824, 4
        %v826 = vmax.f32 %v824, %v825
        %v827 = vrot.slane %v826, 2
        %v828 = vmax.f32 %v826, %v827
        %v829 = vrot.slane %v828, 1
        %v830 = vmax.f32 %v828, %v829
        %v831 = vsel %vm238, %v792, -inf
        %v832 = vsel %vm238, %v793, -inf
        %v833 = vmax.f32 %v831, %v832
        %v834 = vrot.slane %v833, 4
        %v835 = vmax.f32 %v833, %v834
        %v836 = vrot.slane %v835, 2
        %v837 = vmax.f32 %v835, %v836
        %v838 = vrot.slane %v837, 1
        %v839 = vmax.f32 %v837, %v838
        %v840 = vsel %vm238, %v794, -inf
        %v841 = vsel %vm238, %v795, -inf
        %v842 = vmax.f32 %v840, %v841
        %v843 = vrot.slane %v842, 4
        %v844 = vmax.f32 %v842, %v843
        %v845 = vrot.slane %v844, 2
        %v846 = vmax.f32 %v844, %v845
        %v847 = vrot.slane %v846, 1
        %v848 = vmax.f32 %v846, %v847
        %v849 = vsel %vm238, %v796, -inf
        %v850 = vsel %vm238, %v797, -inf
        %v851 = vmax.f32 %v849, %v850
        %v852 = vrot.slane %v851, 4
        %v853 = vmax.f32 %v851, %v852
        %v854 = vrot.slane %v853, 2
        %v855 = vmax.f32 %v853, %v854
        %v856 = vrot.slane %v855, 1
        %v857 = vmax.f32 %v855, %v856
        %v858 = vsel %vm238, %v798, -inf
        %v859 = vsel %vm238, %v799, -inf
        %v860 = vmax.f32 %v858, %v859
        %v861 = vrot.slane %v860, 4
        %v862 = vmax.f32 %v860, %v861
        %v863 = vrot.slane %v862, 2
        %v864 = vmax.f32 %v862, %v863
        %v865 = vrot.slane %v864, 1
        %v866 = vmax.f32 %v864, %v865
        %v867 = vsel %vm238, %v800, -inf
        %v868 = vsel %vm238, %v801, -inf
        %v869 = vmax.f32 %v867, %v868
        %v870 = vrot.slane %v869, 4
        %v871 = vmax.f32 %v869, %v870
        %v872 = vrot.slane %v871, 2
        %v873 = vmax.f32 %v871, %v872
        %v874 = vrot.slane %v873, 1
        %v875 = vmax.f32 %v873, %v874
        %v876 = vsel %vm238, %v802, -inf
        %v877 = vsel %vm238, %v803, -inf
        %v878 = vmax.f32 %v876, %v877
        %v879 = vrot.slane %v878, 4
        %v880 = vmax.f32 %v878, %v879
        %v881 = vrot.slane %v880, 2
        %v882 = vmax.f32 %v880, %v881
        %v883 = vrot.slane %v882, 1
        %v884 = vmax.f32 %v882, %v883
        %v885 = vsel %vm238, %v804, -inf
        %v886 = vsel %vm238, %v805, -inf
        %v887 = vmax.f32 %v885, %v886
        %v888 = vrot.slane %v887, 4
        %v889 = vmax.f32 %v887, %v888
        %v890 = vrot.slane %v889, 2
        %v891 = vmax.f32 %v889, %v890
        %v892 = vrot.slane %v891, 1
        %v893 = vmax.f32 %v891, %v892
        %v894 = vsel %vm238, %v806, -inf
        %v895 = vsel %vm238, %v807, -inf
        %v896 = vmax.f32 %v894, %v895
        %v897 = vrot.slane %v896, 4
        %v898 = vmax.f32 %v896, %v897
        %v899 = vrot.slane %v898, 2
        %v900 = vmax.f32 %v898, %v899
        %v901 = vrot.slane %v900, 1
        %v902 = vmax.f32 %v900, %v901
        %v903 = vsel %vm238, %v808, -inf
        %v904 = vsel %vm238, %v809, -inf
        %v905 = vmax.f32 %v903, %v904
        %v906 = vrot.slane %v905, 4
        %v907 = vmax.f32 %v905, %v906
        %v908 = vrot.slane %v907, 2
        %v909 = vmax.f32 %v907, %v908
        %v910 = vrot.slane %v909, 1
        %v911 = vmax.f32 %v909, %v910
        %v912 = vsel %vm238, %v810, -inf
        %v913 = vsel %vm238, %v811, -inf
        %v914 = vmax.f32 %v912, %v913
        %v915 = vrot.slane %v914, 4
        %v916 = vmax.f32 %v914, %v915
        %v917 = vrot.slane %v916, 2
        %v918 = vmax.f32 %v916, %v917
        %v919 = vrot.slane %v918, 1
        %v920 = vmax.f32 %v918, %v919
        %v921 = vsel %vm238, %v812, -inf
        %v922 = vsel %vm238, %v813, -inf
        %v923 = vmax.f32 %v921, %v922
        %v924 = vrot.slane %v923, 4
        %v925 = vmax.f32 %v923, %v924
        %v926 = vrot.slane %v925, 2
        %v927 = vmax.f32 %v925, %v926
        %v928 = vrot.slane %v927, 1
        %v929 = vmax.f32 %v927, %v928
        %v930 = vsel %vm238, %v814, -inf
        %v931 = vsel %vm238, %v815, -inf
        %v932 = vmax.f32 %v930, %v931
        %v933 = vrot.slane %v932, 4
        %v934 = vmax.f32 %v932, %v933
        %v935 = vrot.slane %v934, 2
        %v936 = vmax.f32 %v934, %v935
        %v937 = vrot.slane %v936, 1
        %v938 = vmax.f32 %v936, %v937
        %v939 = vsel %vm238, %v816, -inf
        %v940 = vsel %vm238, %v817, -inf
        %v941 = vmax.f32 %v939, %v940
        %v942 = vrot.slane %v941, 4
        %v943 = vmax.f32 %v941, %v942
        %v944 = vrot.slane %v943, 2
        %v945 = vmax.f32 %v943, %v944
        %v946 = vrot.slane %v945, 1
        %v947 = vmax.f32 %v945, %v946
        %v948 = vsel %vm238, %v818, -inf
        %v949 = vsel %vm238, %v819, -inf
        %v950 = vmax.f32 %v948, %v949
        %v951 = vrot.slane %v950, 4
        %v952 = vmax.f32 %v950, %v951
        %v953 = vrot.slane %v952, 2
        %v954 = vmax.f32 %v952, %v953
        %v955 = vrot.slane %v954, 1
        %v956 = vmax.f32 %v954, %v955
        %v957 = vsel %vm238, %v820, -inf
        %v958 = vsel %vm238, %v821, -inf
        %v959 = vmax.f32 %v957, %v958
        %v960 = vrot.slane %v959, 4
        %v961 = vmax.f32 %v959, %v960
        %v962 = vrot.slane %v961, 2
        %v963 = vmax.f32 %v961, %v962
        %v964 = vrot.slane %v963, 1
        %v965 = vmax.f32 %v963, %v964
        %s966 = sld [smem:[#allocation5 + %s47]]
        %s967 = sld [smem:[#allocation6 + %s47]]
        %v968 = vstv %s966
        %vm969 = vcmp.ge.s32.totalorder %v190, %v968
        %vm970 = vcmp.ge.s32.totalorder %v191, %v968
        %v971 = vstv %s967
        %vm972 = vcmp.lt.s32.totalorder %v190, %v971
        %vm973 = vcmp.lt.s32.totalorder %v191, %v971
        %vm974 = vmand %vm969, %vm972
        %vm975 = vmand %vm970, %vm973
        %v976 = vsel %vm974, 1, 0
        %v977 = vsel %vm975, 1, 0
        %vm978 = vcmp.eq.s32.totalorder %v976, 1
        %vm979 = vcmp.eq.s32.totalorder %v977, 1
        %v1044 = vrot.slane %v256, 7
        %vm1045 = vcmask 1041409
        %v1046 = vsel %vm1045, %v1044, %v247
        %v1047 = vrot.slane %v265, 6
        %vm1048 = vcmask 1042434
        %v1049 = vsel %vm1048, %v1047, %v1046
        %v1050 = vrot.slane %v274, 5
        %vm1051 = vcmask 1043459
        %v1052 = vsel %vm1051, %v1050, %v1049
        %v1053 = vrot.slane %v283, 4
        %vm1054 = vcmask 1044484
        %v1055 = vsel %vm1054, %v1053, %v1052
        %v1056 = vrot.slane %v292, 3
        %vm1057 = vcmask 1045509
        %v1058 = vsel %vm1057, %v1056, %v1055
        %v1059 = vrot.slane %v301, 2
        %vm1060 = vcmask 1046534
        %v1061 = vsel %vm1060, %v1059, %v1058
        %v1062 = vrot.slane %v310, 1
        %vm1063 = vcmask 1047559
        %v1064 = vsel %vm1063, %v1062, %v1061
        %v1065 = vrot.slane %v328, 7
        %v1066 = vsel %vm1045, %v1065, %v319
        %v1067 = vrot.slane %v337, 6
        %v1068 = vsel %vm1048, %v1067, %v1066
        %v1069 = vrot.slane %v346, 5
        %v1070 = vsel %vm1051, %v1069, %v1068
        %v1071 = vrot.slane %v355, 4
        %v1072 = vsel %vm1054, %v1071, %v1070
        %v1073 = vrot.slane %v364, 3
        %v1074 = vsel %vm1057, %v1073, %v1072
        %v1075 = vrot.slane %v373, 2
        %v1076 = vsel %vm1060, %v1075, %v1074
        %v1077 = vrot.slane %v382, 1
        %v1078 = vsel %vm1063, %v1077, %v1076
        %v1079 = vrot.slane %v453, 7
        %v1080 = vsel %vm1045, %v1079, %v444
        %v1081 = vrot.slane %v462, 6
        %v1082 = vsel %vm1048, %v1081, %v1080
        %v1083 = vrot.slane %v471, 5
        %v1084 = vsel %vm1051, %v1083, %v1082
        %v1085 = vrot.slane %v480, 4
        %v1086 = vsel %vm1054, %v1085, %v1084
        %v1087 = vrot.slane %v489, 3
        %v1088 = vsel %vm1057, %v1087, %v1086
        %v1089 = vrot.slane %v498, 2
        %v1090 = vsel %vm1060, %v1089, %v1088
        %v1091 = vrot.slane %v507, 1
        %v1092 = vsel %vm1063, %v1091, %v1090
        %v1093 = vrot.slane %v525, 7
        %v1094 = vsel %vm1045, %v1093, %v516
        %v1095 = vrot.slane %v534, 6
        %v1096 = vsel %vm1048, %v1095, %v1094
        %v1097 = vrot.slane %v543, 5
        %v1098 = vsel %vm1051, %v1097, %v1096
        %v1099 = vrot.slane %v552, 4
        %v1100 = vsel %vm1054, %v1099, %v1098
        %v1101 = vrot.slane %v561, 3
        %v1102 = vsel %vm1057, %v1101, %v1100
        %v1103 = vrot.slane %v570, 2
        %v1104 = vsel %vm1060, %v1103, %v1102
        %v1105 = vrot.slane %v579, 1
        %v1106 = vsel %vm1063, %v1105, %v1104
        %v1107 = vrot.slane %v646, 7
        %v1108 = vsel %vm1045, %v1107, %v637
        %v1109 = vrot.slane %v655, 6
        %v1110 = vsel %vm1048, %v1109, %v1108
        %v1111 = vrot.slane %v664, 5
        %v1112 = vsel %vm1051, %v1111, %v1110
        %v1113 = vrot.slane %v673, 4
        %v1114 = vsel %vm1054, %v1113, %v1112
        %v1115 = vrot.slane %v682, 3
        %v1116 = vsel %vm1057, %v1115, %v1114
        %v1117 = vrot.slane %v691, 2
        %v1118 = vsel %vm1060, %v1117, %v1116
        %v1119 = vrot.slane %v700, 1
        %v1120 = vsel %vm1063, %v1119, %v1118
        %v1121 = vrot.slane %v718, 7
        %v1122 = vsel %vm1045, %v1121, %v709
        %v1123 = vrot.slane %v727, 6
        %v1124 = vsel %vm1048, %v1123, %v1122
        %v1125 = vrot.slane %v736, 5
        %v1126 = vsel %vm1051, %v1125, %v1124
        %v1127 = vrot.slane %v745, 4
        %v1128 = vsel %vm1054, %v1127, %v1126
        %v1129 = vrot.slane %v754, 3
        %v1130 = vsel %vm1057, %v1129, %v1128
        %v1131 = vrot.slane %v763, 2
        %v1132 = vsel %vm1060, %v1131, %v1130
        %v1133 = vrot.slane %v772, 1
        %v1134 = vsel %vm1063, %v1133, %v1132
        %v1135 = vrot.slane %v839, 7
        %v1136 = vsel %vm1045, %v1135, %v830
        %v1137 = vrot.slane %v848, 6
        %v1138 = vsel %vm1048, %v1137, %v1136
        %v1139 = vrot.slane %v857, 5
        %v1140 = vsel %vm1051, %v1139, %v1138
        %v1141 = vrot.slane %v866, 4
        %v1142 = vsel %vm1054, %v1141, %v1140
        %v1143 = vrot.slane %v875, 3
        %v1144 = vsel %vm1057, %v1143, %v1142
        %v1145 = vrot.slane %v884, 2
        %v1146 = vsel %vm1060, %v1145, %v1144
        %v1147 = vrot.slane %v893, 1
        %v1148 = vsel %vm1063, %v1147, %v1146
        %v1149 = vrot.slane %v911, 7
        %v1150 = vsel %vm1045, %v1149, %v902
        %v1151 = vrot.slane %v920, 6
        %v1152 = vsel %vm1048, %v1151, %v1150
        %v1153 = vrot.slane %v929, 5
        %v1154 = vsel %vm1051, %v1153, %v1152
        %v1155 = vrot.slane %v938, 4
        %v1156 = vsel %vm1054, %v1155, %v1154
        %v1157 = vrot.slane %v947, 3
        %v1158 = vsel %vm1057, %v1157, %v1156
        %v1159 = vrot.slane %v956, 2
        %v1160 = vsel %vm1060, %v1159, %v1158
        %v1161 = vrot.slane %v965, 1
        %v1162 = vsel %vm1063, %v1161, %v1160
        %v1171 = vsel %vm978, %v1064, -inf
        %v1172 = vsel %vm979, %v1078, -inf
        %v1173 = vsel %vm978, %v1092, -inf
        %v1174 = vsel %vm979, %v1106, -inf
        %v1175 = vsel %vm978, %v1120, -inf
        %v1176 = vsel %vm979, %v1134, -inf
        %v1177 = vsel %vm978, %v1148, -inf
        %v1178 = vsel %vm979, %v1162, -inf
        %v1179 = vsel %vm238, %v1171, -inf
        %v1180 = vsel %vm238, %v1172, -inf
        %v1181 = vmax.f32 %v1179, %v1180
        %v1182 = vrot.slane %v1181, 4
        %v1183 = vmax.f32 %v1181, %v1182
        %v1184 = vrot.slane %v1183, 2
        %v1185 = vmax.f32 %v1183, %v1184
        %v1186 = vrot.slane %v1185, 1
        %v1187 = vmax.f32 %v1185, %v1186
        %v1188 = vsel %vm238, %v1173, -inf
        %v1189 = vsel %vm238, %v1174, -inf
        %v1190 = vmax.f32 %v1188, %v1189
        %v1191 = vrot.slane %v1190, 4
        %v1192 = vmax.f32 %v1190, %v1191
        %v1193 = vrot.slane %v1192, 2
        %v1194 = vmax.f32 %v1192, %v1193
        %v1195 = vrot.slane %v1194, 1
        %v1196 = vmax.f32 %v1194, %v1195
        %v1197 = vsel %vm238, %v1175, -inf
        %v1198 = vsel %vm238, %v1176, -inf
        %v1199 = vmax.f32 %v1197, %v1198
        %v1200 = vrot.slane %v1199, 4
        %v1201 = vmax.f32 %v1199, %v1200
        %v1202 = vrot.slane %v1201, 2
        %v1203 = vmax.f32 %v1201, %v1202
        %v1204 = vrot.slane %v1203, 1
        %v1205 = vmax.f32 %v1203, %v1204
        %v1206 = vsel %vm238, %v1177, -inf
        %v1207 = vsel %vm238, %v1178, -inf
        %v1208 = vmax.f32 %v1206, %v1207
        %v1209 = vrot.slane %v1208, 4
        %v1210 = vmax.f32 %v1208, %v1209
        %v1211 = vrot.slane %v1210, 2
        %v1212 = vmax.f32 %v1210, %v1211
        %v1213 = vrot.slane %v1212, 1
        %v1214 = vmax.f32 %v1212, %v1213
        %v1219 = vsel %vm1045, %v1196, %v1187
        %v1220 = vsel %vm1048, %v1205, %v1219
        %v1221 = vsel %vm1051, %v1214, %v1220
        %vm1223 = vcmask 27648
        %1224 = vst.msk [vmem:[%s148] sm:$0xf] %vm1223, %v1221
        %s1225 = sld [smem:[#allocation5 + %s389]]
        %s1226 = sld [smem:[#allocation6 + %s389]]
        %v1227 = vstv %s1225
        %vm1228 = vcmp.ge.s32.totalorder %v190, %v1227
        %vm1229 = vcmp.ge.s32.totalorder %v191, %v1227
        %v1230 = vstv %s1226
        %vm1231 = vcmp.lt.s32.totalorder %v190, %v1230
        %vm1232 = vcmp.lt.s32.totalorder %v191, %v1230
        %vm1233 = vmand %vm1228, %vm1231
        %vm1234 = vmand %vm1229, %vm1232
        %v1235 = vsel %vm1233, 1, 0
        %v1236 = vsel %vm1234, 1, 0
        %vm1237 = vcmp.eq.s32.totalorder %v1235, 1
        %vm1238 = vcmp.eq.s32.totalorder %v1236, 1
        %v1239 = vsel %vm1237, %v1064, -inf
        %v1240 = vsel %vm1238, %v1078, -inf
        %v1241 = vsel %vm1237, %v1092, -inf
        %v1242 = vsel %vm1238, %v1106, -inf
        %v1243 = vsel %vm1237, %v1120, -inf
        %v1244 = vsel %vm1238, %v1134, -inf
        %v1245 = vsel %vm1237, %v1148, -inf
        %v1246 = vsel %vm1238, %v1162, -inf
        %v1247 = vsel %vm238, %v1239, -inf
        %v1248 = vsel %vm238, %v1240, -inf
        %v1249 = vmax.f32 %v1247, %v1248
        %v1250 = vrot.slane %v1249, 4
        %v1251 = vmax.f32 %v1249, %v1250
        %v1252 = vrot.slane %v1251, 2
        %v1253 = vmax.f32 %v1251, %v1252
        %v1254 = vrot.slane %v1253, 1
        %v1255 = vmax.f32 %v1253, %v1254
        %v1256 = vsel %vm238, %v1241, -inf
        %v1257 = vsel %vm238, %v1242, -inf
        %v1258 = vmax.f32 %v1256, %v1257
        %v1259 = vrot.slane %v1258, 4
        %v1260 = vmax.f32 %v1258, %v1259
        %v1261 = vrot.slane %v1260, 2
        %v1262 = vmax.f32 %v1260, %v1261
        %v1263 = vrot.slane %v1262, 1
        %v1264 = vmax.f32 %v1262, %v1263
        %v1265 = vsel %vm238, %v1243, -inf
        %v1266 = vsel %vm238, %v1244, -inf
        %v1267 = vmax.f32 %v1265, %v1266
        %v1268 = vrot.slane %v1267, 4
        %v1269 = vmax.f32 %v1267, %v1268
        %v1270 = vrot.slane %v1269, 2
        %v1271 = vmax.f32 %v1269, %v1270
        %v1272 = vrot.slane %v1271, 1
        %v1273 = vmax.f32 %v1271, %v1272
        %v1274 = vsel %vm238, %v1245, -inf
        %v1275 = vsel %vm238, %v1246, -inf
        %v1276 = vmax.f32 %v1274, %v1275
        %v1277 = vrot.slane %v1276, 4
        %v1278 = vmax.f32 %v1276, %v1277
        %v1279 = vrot.slane %v1278, 2
        %v1280 = vmax.f32 %v1278, %v1279
        %v1281 = vrot.slane %v1280, 1
        %v1282 = vmax.f32 %v1280, %v1281
        %v1287 = vsel %vm1045, %v1264, %v1255
        %v1288 = vsel %vm1048, %v1273, %v1287
        %v1289 = vsel %vm1051, %v1282, %v1288
        %s1291 = scalar_lea.vmem %s148, 4 [#allocation9]
        %1292 = vst.msk [vmem:[%s1291] sm:$0xf] %vm1223, %v1289
        %s1293 = sld [smem:[#allocation5 + %s582]]
        %s1294 = sld [smem:[#allocation6 + %s582]]
        %v1295 = vstv %s1293
        %vm1296 = vcmp.ge.s32.totalorder %v190, %v1295
        %vm1297 = vcmp.ge.s32.totalorder %v191, %v1295
        %v1298 = vstv %s1294
        %vm1299 = vcmp.lt.s32.totalorder %v190, %v1298
        %vm1300 = vcmp.lt.s32.totalorder %v191, %v1298
        %vm1301 = vmand %vm1296, %vm1299
        %vm1302 = vmand %vm1297, %vm1300
        %v1303 = vsel %vm1301, 1, 0
        %v1304 = vsel %vm1302, 1, 0
        %vm1305 = vcmp.eq.s32.totalorder %v1303, 1
        %vm1306 = vcmp.eq.s32.totalorder %v1304, 1
        %v1307 = vsel %vm1305, %v1064, -inf
        %v1308 = vsel %vm1306, %v1078, -inf
        %v1309 = vsel %vm1305, %v1092, -inf
        %v1310 = vsel %vm1306, %v1106, -inf
        %v1311 = vsel %vm1305, %v1120, -inf
        %v1312 = vsel %vm1306, %v1134, -inf
        %v1313 = vsel %vm1305, %v1148, -inf
        %v1314 = vsel %vm1306, %v1162, -inf
        %v1315 = vsel %vm238, %v1307, -inf
        %v1316 = vsel %vm238, %v1308, -inf
        %v1317 = vmax.f32 %v1315, %v1316
        %v1318 = vrot.slane %v1317, 4
        %v1319 = vmax.f32 %v1317, %v1318
        %v1320 = vrot.slane %v1319, 2
        %v1321 = vmax.f32 %v1319, %v1320
        %v1322 = vrot.slane %v1321, 1
        %v1323 = vmax.f32 %v1321, %v1322
        %v1324 = vsel %vm238, %v1309, -inf
        %v1325 = vsel %vm238, %v1310, -inf
        %v1326 = vmax.f32 %v1324, %v1325
        %v1327 = vrot.slane %v1326, 4
        %v1328 = vmax.f32 %v1326, %v1327
        %v1329 = vrot.slane %v1328, 2
        %v1330 = vmax.f32 %v1328, %v1329
        %v1331 = vrot.slane %v1330, 1
        %v1332 = vmax.f32 %v1330, %v1331
        %v1333 = vsel %vm238, %v1311, -inf
        %v1334 = vsel %vm238, %v1312, -inf
        %v1335 = vmax.f32 %v1333, %v1334
        %v1336 = vrot.slane %v1335, 4
        %v1337 = vmax.f32 %v1335, %v1336
        %v1338 = vrot.slane %v1337, 2
        %v1339 = vmax.f32 %v1337, %v1338
        %v1340 = vrot.slane %v1339, 1
        %v1341 = vmax.f32 %v1339, %v1340
        %v1342 = vsel %vm238, %v1313, -inf
        %v1343 = vsel %vm238, %v1314, -inf
        %v1344 = vmax.f32 %v1342, %v1343
        %v1345 = vrot.slane %v1344, 4
        %v1346 = vmax.f32 %v1344, %v1345
        %v1347 = vrot.slane %v1346, 2
        %v1348 = vmax.f32 %v1346, %v1347
        %v1349 = vrot.slane %v1348, 1
        %v1350 = vmax.f32 %v1348, %v1349
        %v1355 = vsel %vm1045, %v1332, %v1323
        %v1356 = vsel %vm1048, %v1341, %v1355
        %v1357 = vsel %vm1051, %v1350, %v1356
        %s1359 = scalar_lea.vmem %s148, 8 [#allocation9]
        %1360 = vst.msk [vmem:[%s1359] sm:$0xf] %vm1223, %v1357
        %s1361 = sld [smem:[#allocation5 + %s775]]
        %s1362 = sld [smem:[#allocation6 + %s775]]
        %v1363 = vstv %s1361
        %vm1364 = vcmp.ge.s32.totalorder %v190, %v1363
        %vm1365 = vcmp.ge.s32.totalorder %v191, %v1363
        %v1366 = vstv %s1362
        %vm1367 = vcmp.lt.s32.totalorder %v190, %v1366
        %vm1368 = vcmp.lt.s32.totalorder %v191, %v1366
        %vm1369 = vmand %vm1364, %vm1367
        %vm1370 = vmand %vm1365, %vm1368
        %v1371 = vsel %vm1369, 1, 0
        %v1372 = vsel %vm1370, 1, 0
        %vm1373 = vcmp.eq.s32.totalorder %v1371, 1
        %vm1374 = vcmp.eq.s32.totalorder %v1372, 1
        %v1375 = vsel %vm1373, %v1064, -inf
        %v1376 = vsel %vm1374, %v1078, -inf
        %v1377 = vsel %vm1373, %v1092, -inf
        %v1378 = vsel %vm1374, %v1106, -inf
        %v1379 = vsel %vm1373, %v1120, -inf
        %v1380 = vsel %vm1374, %v1134, -inf
        %v1381 = vsel %vm1373, %v1148, -inf
        %v1382 = vsel %vm1374, %v1162, -inf
        %v1383 = vsel %vm238, %v1375, -inf
        %v1384 = vsel %vm238, %v1376, -inf
        %v1385 = vmax.f32 %v1383, %v1384
        %v1386 = vrot.slane %v1385, 4
        %v1387 = vmax.f32 %v1385, %v1386
        %v1388 = vrot.slane %v1387, 2
        %v1389 = vmax.f32 %v1387, %v1388
        %v1390 = vrot.slane %v1389, 1
        %v1391 = vmax.f32 %v1389, %v1390
        %v1392 = vsel %vm238, %v1377, -inf
        %v1393 = vsel %vm238, %v1378, -inf
        %v1394 = vmax.f32 %v1392, %v1393
        %v1395 = vrot.slane %v1394, 4
        %v1396 = vmax.f32 %v1394, %v1395
        %v1397 = vrot.slane %v1396, 2
        %v1398 = vmax.f32 %v1396, %v1397
        %v1399 = vrot.slane %v1398, 1
        %v1400 = vmax.f32 %v1398, %v1399
        %v1401 = vsel %vm238, %v1379, -inf
        %v1402 = vsel %vm238, %v1380, -inf
        %v1403 = vmax.f32 %v1401, %v1402
        %v1404 = vrot.slane %v1403, 4
        %v1405 = vmax.f32 %v1403, %v1404
        %v1406 = vrot.slane %v1405, 2
        %v1407 = vmax.f32 %v1405, %v1406
        %v1408 = vrot.slane %v1407, 1
        %v1409 = vmax.f32 %v1407, %v1408
        %v1410 = vsel %vm238, %v1381, -inf
        %v1411 = vsel %vm238, %v1382, -inf
        %v1412 = vmax.f32 %v1410, %v1411
        %v1413 = vrot.slane %v1412, 4
        %v1414 = vmax.f32 %v1412, %v1413
        %v1415 = vrot.slane %v1414, 2
        %v1416 = vmax.f32 %v1414, %v1415
        %v1417 = vrot.slane %v1416, 1
        %v1418 = vmax.f32 %v1416, %v1417
        %v1423 = vsel %vm1045, %v1400, %v1391
        %v1424 = vsel %vm1048, %v1409, %v1423
        %v1425 = vsel %vm1051, %v1418, %v1424
        %s1427 = scalar_lea.vmem %s148, 12 [#allocation9]
        %1428 = vst.msk [vmem:[%s1427] sm:$0xf] %vm1223, %v1425
        %s1429 = sand.u32 %s85, 1
        %s1430 = scalar_lea.sflag [#allocation10], %s1429
        %s1431 = sand.u32 %s85, 1
        %s1432 = smul.addr %s1431, 16
        %s1433 = scalar_lea.vmem [#allocation9], %s1432
        // Predicated region
        $region25: #{tpu_custom_call.1} parent=23 // pred_check
          %p1434 = pneg %p95
        $region26: #{tpu_custom_call.1} parent=23 // pred_check_branch
          %1436 = sbr.rel (%p1434) target = $region28
        $region27: #{tpu_custom_call.1} parent=23 // pred_region
          %s1437 = sld [smem:[#allocation4 + %s47]]
          %s1439 = ssub.s32 256, 256
          %1440 = vsyncadd %s1430, %s1439
          %s1441 = smul.addr %s1437, 4
          %s1442 = smul.addr %s1441, 64
          %s1443 = scalar_lea.hbm %s7, %s1442
          %s1444 = sshll.u32 %s1433, 4
          %s1445 = int_to_ptr.vmem [resolvable:$true] %s1444
          %1450 = dma.vmem_to_hbm [thread:$0]  %s1445, 256, %s1443, %s1430, 64, 64, 4
        $region28: #{tpu_custom_call.1} parent=23 // pred_fallthru
          _
      $region24: #{tpu_custom_call.1} parent=5 // pred_fallthru
        _
      %p1451 = scmp.le.s32.totalorder 2, %s42
      // Predicated region
      $region29: #{tpu_custom_call.1} parent=5 // pred_check
        %p1452 = pneg %p1451
      $region30: #{tpu_custom_call.1} parent=5 // pred_check_branch
        %1454 = sbr.rel (%p1452) target = $region32
      $region31: #{tpu_custom_call.1} parent=5 // pred_region
        %s1455 = ssub.s32 %s42, 2
        // Predicated region
        $region33: #{tpu_custom_call.1} parent=31 // pred_check
          %p1456 = pneg %p101
        $region34: #{tpu_custom_call.1} parent=31 // pred_check_branch
          %1458 = sbr.rel (%p1456) target = $region36
        $region35: #{tpu_custom_call.1} parent=31 // pred_region
          %s1459 = sand.u32 %s86, 1
          %s1460 = scalar_lea.sflag [#allocation10], %s1459
          %s1461 = sand.u32 %s86, 1
          %s1462 = smul.addr %s1461, 16
          %s1463 = scalar_lea.vmem [#allocation9], %s1462
          %1464 = dma.done %s1460, 256
        $region36: #{tpu_custom_call.1} parent=31 // pred_fallthru
          _
      $region32: #{tpu_custom_call.1} parent=5 // pred_fallthru
        _
    $region6: #{tpu_custom_call.1} parent=1 // loop_footer
      %s46 = sadd.s32 1, %s42
    $region7: #{tpu_custom_call.1} parent=1 // loop_footer_branch
      %41 = sbr.rel target = $region3
    $region8: #{tpu_custom_call.1} parent=1 // loop_exit
      _
    %1465 = vsyncpa [#allocation10], 1
    %s1466 = scalar_lea.sflag [#allocation10], 1
    %1467 = vsyncpa %s1466, 1

</llo_original>
